<compile_context>
chip_gen: v7x
topology: tpu7x:2x2x1
jax: 0.10.0
libtpu: 0.0.40
codegen_flags: <defaults>
</compile_context>

<pallas_src>
import functools
import numpy as np
import jax
import jax.numpy as jnp
from jax import lax
from jax.experimental import pallas as pl
from jax.experimental.pallas import tpu as pltpu


def _round_up(x, m):
    return (x + m - 1) // m * m


def _pick_seq_chunk(L, Bt, target_rows=512):
    """Largest timestep chunk Lt with L % Lt == 0 keeping Lt*Bt rows modest & 8-aligned."""
    t = max(1, target_rows // max(Bt, 1))
    if L <= t:
        return L
    for c in range(min(t, L), 0, -1):
        if L % c == 0 and (c * Bt) % 8 == 0:
            return c
    return L


# ----------------------------------------------------------------------------- kernel
def s5_kernel(ss_ref,                  # SMEM [1]     step_scale (scalar prefetch)
              sig_ref,                 # VMEM [N, H]  signal rows (l-major, b-minor)
              wcat_ref,                # VMEM [H, K]  fused x_proj weight (bf16)
              wdtp_ref,                # VMEM [1, H]  dt_proj.weight
              lam_ref,                 # VMEM [2, P]  Lambda (row0=re, row1=im)
              d_ref,                   # VMEM [1, H]  D
              y_ref,                   # VMEM [N, H]  output rows
              str_ref,                 # VMEM [Bt, P] final state (re), resident over L chunks
              sti_ref,                 # VMEM [Bt, P] final state (im)
              a_re_s, a_im_s,          # VMEM [N, P]  Lambda_bar
              bu_re_s, bu_im_s,        # VMEM [N, P]  Bu (overwritten by xs in the scan)
              *, H, P, Hpad, Ppad, Bt, Lt, unroll):
    li = pl.program_id(1)
    ss = ss_ref[0]

    s = sig_ref[...]                                                    # [N, H] f32

    # ---- fused projection: one lane-dense bf16 MXU matmul -> dt / B / C heads ----
    proj = jnp.dot(s.astype(jnp.bfloat16), wcat_ref[...],
                   preferred_element_type=jnp.float32)                  # [N, K]
    ob = 128
    dt_raw = proj[:, 0:1]                                               # [N, 1]
    bre = proj[:, ob:ob + H]                                            # [N, H]
    bim = proj[:, ob + Hpad:ob + Hpad + H]
    oc = ob + 2 * Hpad
    cre = proj[:, oc:oc + P]                                            # [N, P]
    cim = proj[:, oc + Ppad:oc + Ppad + P]

    # ---- dt = dt_proj.weight * dt_raw (bias is NOT used by the reference forward) ----
    dt = dt_raw * wdtp_ref[...]                                         # [N, H]
    delta = ss * jnp.exp(dt)                                            # [N, P] (P == H)

    # ---- bilinear discretization of the diagonal Lambda ----
    lam_re = lam_ref[0:1, :]
    lam_im = lam_ref[1:2, :]
    half = 0.5 * delta
    den_re = 1.0 - half * lam_re
    den_im = -half * lam_im
    inv = 1.0 / (den_re * den_re + den_im * den_im)
    bl_re = den_re * inv                                                # BL = 1/(1 - d/2*lam)
    bl_im = -den_im * inv
    num_re = 1.0 + half * lam_re
    num_im = half * lam_im
    a_re_s[...] = bl_re * num_re - bl_im * num_im                       # Lambda_bar (re)
    a_im_s[...] = bl_re * num_im + bl_im * num_re                       # Lambda_bar (im)

    # ---- Bu[l] = (BL*Delta) * (B_tilde[l] @ u[l]);  rank-1 B_tilde collapses to a
    #      lane reduction + scale
    btu_re = bre * jnp.sum(bre * s, axis=-1, keepdims=True)
    btu_im = bim * jnp.sum(bim * s, axis=-1, keepdims=True)
    coef_re = bl_re * delta
    coef_im = bl_im * delta
    bu_re_s[...] = coef_re * btu_re - coef_im * btu_im
    bu_im_s[...] = coef_im * btu_re + coef_re * btu_im

    # ---- D*u feed-through stored now, so s / bre / bim are dead across the serial loop
    y_ref[...] = d_ref[...] * s

    # ---- sequential linear recurrence: state carried in vregs; chunk-boundary state
    #      lives in the resident st_re/st_im output blocks across the L grid axis.
    @pl.when(li == 0)
    def _():
        str_ref[...] = jnp.zeros_like(str_ref)
        sti_ref[...] = jnp.zeros_like(sti_ref)

    step_rows = unroll * Bt

    def chunk(k, carry):
        xr, xi = carry
        base = pl.multiple_of(k * step_rows, step_rows)
        for u in range(unroll):
            row = base + u * Bt
            ar = a_re_s[pl.ds(row, Bt), :]
            ai = a_im_s[pl.ds(row, Bt), :]
            br = bu_re_s[pl.ds(row, Bt), :]
            bi = bu_im_s[pl.ds(row, Bt), :]
            xr, xi = ar * xr - ai * xi + br, ai * xr + ar * xi + bi
            bu_re_s[pl.ds(row, Bt), :] = xr     # scan output xs overwrites Bu in place
            bu_im_s[pl.ds(row, Bt), :] = xi
        return xr, xi

    xr, xi = lax.fori_loop(0, Lt // unroll, chunk, (str_ref[...], sti_ref[...]))
    str_ref[...] = xr
    sti_ref[...] = xi

    # ---- output projection hoisted out of the loop: y = Re(C_tilde @ x) + D*u,
    #      one dense vector pass and a single dense store.
    xs_re = bu_re_s[...]
    xs_im = bu_im_s[...]
    y_ref[...] = (y_ref[...]
                  + cre * jnp.sum(cre * xs_re, axis=-1, keepdims=True)
                  - cim * jnp.sum(cim * xs_im, axis=-1, keepdims=True))


# ----------------------------------------------------------------------------- wrapper
def s5_forward(signal, prev_state, params, step_scale=1.0):
    B, L, H = signal.shape
    P = params["lambda_re"].shape[0]
    assert P == H, "this S5 configuration uses state_width == width"
    del prev_state  # no-op in the reference forward (see TODO in header)

    Hpad = _round_up(H, 128)
    Ppad = _round_up(P, 128)
    K = 128 + 2 * Hpad + 2 * Ppad

    # ---- pack x_proj into one 128-lane-aligned, de-interleaved weight (bf16) ----
    wx = params["x_proj"].astype(jnp.float32)            # [(H+P)*2+1, H]
    wb = wx[1:1 + 2 * H, :]
    wc = wx[1 + 2 * H:, :]
    wcat = jnp.zeros((H, K), jnp.float32)
    wcat = wcat.at[:, 0].set(wx[0, :])                   # dt head (column 0)
    wcat = wcat.at[:, 128:128 + H].set(wb[0::2, :].T)    # B real head
    wcat = wcat.at[:, 128 + Hpad:128 + Hpad + H].set(wb[1::2, :].T)   # B imag head
    oc = 128 + 2 * Hpad
    wcat = wcat.at[:, oc:oc + P].set(wc[0::2, :].T)      # C real head
    wcat = wcat.at[:, oc + Ppad:oc + Ppad + P].set(wc[1::2, :].T)     # C imag head
    wcat = wcat.astype(jnp.bfloat16)

    wdtp = params["dt_proj_w"].reshape(1, H).astype(jnp.float32)
    lam = jnp.stack([params["lambda_re"], params["lambda_im"]]).astype(jnp.float32)  # [2, P]
    d = params["D"].reshape(1, H).astype(jnp.float32)
    ss = jnp.reshape(jnp.asarray(step_scale, jnp.float32), (1,))

    # ---- batch / sequence tiling (batch tile padded to a sublane multiple) ----
    Bt = min(_round_up(B, 8), 32)
    B_pad = _round_up(B, Bt)
    nb = B_pad // Bt
    Lt = _pick_seq_chunk(L, Bt)
    nl = L // Lt
    unroll = next(u for u in (8, 4, 2, 1) if Lt % u == 0)
    N = Lt * Bt

    sig = signal.astype(jnp.float32)
    if B_pad > B:
        sig = jnp.pad(sig, ((0, B_pad - B), (0, 0), (0, 0)))
    # [B_pad, L, H] -> [nb, L*Bt, H]; inside each batch tile rows are l-major, b-minor,
    # so every (batch-tile, seq-chunk) block is a contiguous 2-D slab.
    sig = sig.reshape(nb, Bt, L, H).transpose(0, 2, 1, 3).reshape(nb, L * Bt, H)

    kernel = functools.partial(s5_kernel, H=H, P=P, Hpad=Hpad, Ppad=Ppad,
                               Bt=Bt, Lt=Lt, unroll=unroll)

    grid_spec = pltpu.PrefetchScalarGridSpec(
        num_scalar_prefetch=1,
        grid=(nb, nl),
        in_specs=[
            pl.BlockSpec((None, N, H), lambda b, l, _: (b, l, 0)),    # signal rows
            pl.BlockSpec((H, K), lambda b, l, _: (0, 0)),             # fused x_proj
            pl.BlockSpec((1, H), lambda b, l, _: (0, 0)),             # dt_proj weight
            pl.BlockSpec((2, P), lambda b, l, _: (0, 0)),             # Lambda (re, im)
            pl.BlockSpec((1, H), lambda b, l, _: (0, 0)),             # D
        ],
        out_specs=[
            pl.BlockSpec((None, N, H), lambda b, l, _: (b, l, 0)),    # y rows
            pl.BlockSpec((None, Bt, P), lambda b, l, _: (b, 0, 0)),   # final state (re)
            pl.BlockSpec((None, Bt, P), lambda b, l, _: (b, 0, 0)),   # final state (im)
        ],
        scratch_shapes=[pltpu.VMEM((N, P), jnp.float32)] * 4,
    )

    y, st_re, st_im = pl.pallas_call(
        kernel,
        grid_spec=grid_spec,
        out_shape=(
            jax.ShapeDtypeStruct((nb, L * Bt, H), jnp.float32),
            jax.ShapeDtypeStruct((nb, Bt, P), jnp.float32),
            jax.ShapeDtypeStruct((nb, Bt, P), jnp.float32),
        ),
        compiler_params=pltpu.CompilerParams(
            dimension_semantics=("parallel", "arbitrary"),
            vmem_limit_bytes=32 * 1024 * 1024),
    )(ss, sig, wcat, wdtp, lam, d)

    y = y.reshape(nb, L, Bt, H).transpose(0, 2, 1, 3).reshape(B_pad, L, H)[:B]
    x_last = (st_re.reshape(B_pad, P) + 1j * st_im.reshape(B_pad, P))[:B]
    return y, x_last.astype(jnp.complex64)


# --------------------------------------------------------------------- parameter init
def make_dplr_hippo_lambda(n):
    """Eigenvalues of the HiPPO-LegS DPLR matrix (same recipe as S5's make_DPLR_HiPPO)."""
    q = np.arange(n, dtype=np.float64)
    col = np.sqrt(1.0 + 2.0 * q)
    A = -(np.tril(col[:, None] * col[None, :]) - np.diag(q))
    Pv = np.sqrt(q + 0.5)
    S = A + Pv[:, None] * Pv[None, :]
    lam_re = np.mean(np.diagonal(S)) * np.ones(n)
    lam_im = np.linalg.eigvalsh(S * -1j)
    return jnp.asarray(lam_re, jnp.float32), jnp.asarray(lam_im, jnp.float32)


def init_params(key, h, p):
    k1, k2, k3 = jax.random.split(key, 3)
    wx = jax.random.normal(k1, ((h + p) * 2 + 1, h), jnp.float32) / jnp.sqrt(float(h))
    w_dtp = jax.random.normal(k2, (h, 1), jnp.float32) / 8.0     # dt_proj.weight [h,1]
    d = jax.random.uniform(k3, (h,), jnp.float32)                # D ~ U[0,1)
    lam_re, lam_im = make_dplr_hippo_lambda(p)                   # self.Lambda (view_as_real)
    # dt_proj.bias and log_step exist as parameters but are unused by the forward pass.
    return {"x_proj": wx, "dt_proj_w": w_dtp, "D": d,
            "lambda_re": lam_re, "lambda_im": lam_im}


# -------------------------------------------------------------------- plain-JAX reference
def s5_reference(signal, params, step_scale=1.0):
    H = signal.shape[-1]
    P = params["lambda_re"].shape[0]
    wx = params["x_proj"]
    lam = params["lambda_re"].astype(jnp.complex64) + 1j * params["lambda_im"].astype(jnp.complex64)
    w_dtp = params["dt_proj_w"].reshape(-1)
    D = params["D"]

    def one(s):
        # same bf16 projection precision as the kernel's MXU matmul
        dtbc = jnp.dot(s.astype(jnp.bfloat16), wx.T.astype(jnp.bfloat16),
                       preferred_element_type=jnp.float32)
        dt_raw, bf, cf = dtbc[:, 0:1], dtbc[:, 1:1 + 2 * H], dtbc[:, 1 + 2 * H:]
        bre, bim = bf[:, 0::2], bf[:, 1::2]
        cre, cim = cf[:, 0::2], cf[:, 1::2]
        dt = dt_raw * w_dtp[None, :]
        delta = (step_scale * jnp.exp(dt)).astype(jnp.complex64)        # [L, P]
        bl = 1.0 / (1.0 - delta / 2.0 * lam)
        lam_bar = bl * (1.0 + delta / 2.0 * lam)
        # rank-1 B_tilde = outer(bre,bre) + i*outer(bim,bim) applied to real u collapses:
        bu = (bl * delta) * (bre * jnp.sum(bre * s, -1, keepdims=True)
                             + 1j * (bim * jnp.sum(bim * s, -1, keepdims=True)))

        def step(x, inp):
            a, b = inp
            xn = a * x + b
            return xn, xn

        x_last, xs = lax.scan(step, jnp.zeros((P,), jnp.complex64), (lam_bar, bu))
        # Re(C_tilde @ x) with rank-1 C_tilde = outer(cre,cre) + i*outer(cim,cim)
        y = (cre * jnp.sum(cre * xs.real, -1, keepdims=True)
             - cim * jnp.sum(cim * xs.imag, -1, keepdims=True)
             + D[None, :] * s)
        return y, x_last

    return jax.vmap(one)(signal)


# ----------------------------------------------------------------------------- main
if __name__ == "__main__":
    B, L, H = 2, 8, 32          # batch, sequence, width (state_width == width)
    P = H
    key = jax.random.PRNGKey(0)
    k_param, k_sig = jax.random.split(key)
    params = init_params(k_param, H, P)
    signal = jax.random.normal(k_sig, (B, L, H), dtype=jnp.float32)
    prev_state = jnp.zeros((B, P), dtype=jnp.float32)   # == S5.initial_state(B)

    y, x_last = s5_forward(signal, prev_state, params, step_scale=1.0)
    jax.block_until_ready((y, x_last))

    y_ref, x_ref = s5_reference(signal, params, step_scale=1.0)
    assert y.shape == (B, L, H) and y.dtype == jnp.float32
    assert x_last.shape == (B, P) and x_last.dtype == jnp.complex64
    assert jnp.allclose(y, y_ref, rtol=2e-2, atol=2e-2), float(jnp.max(jnp.abs(y - y_ref)))
    assert jnp.allclose(x_last, x_ref, rtol=2e-2, atol=2e-2)
    print("KERNEL_OK")
</pallas_src>

<mosaic_0001>
module attributes {stable_mosaic.version = 11 : i64} {
  func.func @s5_kernel(%arg0: i32, %arg1: i32, %arg2: memref<1xf32, #tpu.memory_space<smem>>, %arg3: memref<1x64x32xf32, #tpu.memory_space<vmem>>, %arg4: memref<32x640xbf16, #tpu.memory_space<vmem>>, %arg5: memref<1x32xf32, #tpu.memory_space<vmem>>, %arg6: memref<2x32xf32, #tpu.memory_space<vmem>>, %arg7: memref<1x32xf32, #tpu.memory_space<vmem>>, %arg8: memref<1x64x32xf32, #tpu.memory_space<vmem>>, %arg9: memref<1x8x32xf32, #tpu.memory_space<vmem>>, %arg10: memref<1x8x32xf32, #tpu.memory_space<vmem>>, %arg11: memref<64x32xf32, #tpu.memory_space<vmem>>, %arg12: memref<64x32xf32, #tpu.memory_space<vmem>>, %arg13: memref<64x32xf32, #tpu.memory_space<vmem>>, %arg14: memref<64x32xf32, #tpu.memory_space<vmem>>) attributes {dimension_semantics = [#tpu.dimension_semantics<parallel>, #tpu.dimension_semantics<arbitrary>], iteration_bounds = array<i64: 1, 1>, scalar_prefetch = 1 : i64, scratch_operands = 4 : i64, tpu.core_type = #tpu.core_type<tc>, window_params = [{transform_indices = @transform_0, window_bounds = array<i64: 1, 64, 32>}, {pipeline_mode = #tpu.pipeline_mode<synchronous>, transform_indices = @transform_1, window_bounds = array<i64: 32, 640>}, {pipeline_mode = #tpu.pipeline_mode<synchronous>, transform_indices = @transform_2, window_bounds = array<i64: 1, 32>}, {pipeline_mode = #tpu.pipeline_mode<synchronous>, transform_indices = @transform_3, window_bounds = array<i64: 2, 32>}, {pipeline_mode = #tpu.pipeline_mode<synchronous>, transform_indices = @transform_4, window_bounds = array<i64: 1, 32>}, {transform_indices = @transform_5, window_bounds = array<i64: 1, 64, 32>}, {transform_indices = @transform_6, window_bounds = array<i64: 1, 8, 32>}, {transform_indices = @transform_7, window_bounds = array<i64: 1, 8, 32>}]} {
    %c0 = arith.constant 0 : index
    %0 = memref.load %arg2[%c0] : memref<1xf32, #tpu.memory_space<smem>>
    %c0_0 = arith.constant 0 : index
    %c0_1 = arith.constant 0 : index
    %c0_2 = arith.constant 0 : index
    %1 = vector.load %arg3[%c0_0, %c0_1, %c0_2] : memref<1x64x32xf32, #tpu.memory_space<vmem>>, vector<1x64x32xf32>
    %2 = vector.shape_cast %1 : vector<1x64x32xf32> to vector<64x32xf32>
    %3 = arith.truncf %2 : vector<64x32xf32> to vector<64x32xbf16>
    %c0_3 = arith.constant 0 : index
    %c0_4 = arith.constant 0 : index
    %4 = vector.load %arg4[%c0_3, %c0_4] : memref<32x640xbf16, #tpu.memory_space<vmem>>, vector<32x640xbf16>
    %cst = arith.constant dense<0.000000e+00> : vector<64x640xf32>
    %5 = tpu.matmul %3, %4, %cst {dimension_numbers = #tpu.dot_dimension_numbers<[1], [0], [0], [1], [0, 0, 1, 1], [], []>} : vector<64x32xbf16>, vector<32x640xbf16>, vector<64x640xf32> -> vector<64x640xf32>
    %6 = vector.extract_strided_slice %5 {offsets = [0, 0], sizes = [64, 1], strides = [1, 1]} : vector<64x640xf32> to vector<64x1xf32>
    %7 = vector.extract_strided_slice %5 {offsets = [0, 128], sizes = [64, 32], strides = [1, 1]} : vector<64x640xf32> to vector<64x32xf32>
    %8 = vector.extract_strided_slice %5 {offsets = [0, 256], sizes = [64, 32], strides = [1, 1]} : vector<64x640xf32> to vector<64x32xf32>
    %9 = vector.extract_strided_slice %5 {offsets = [0, 384], sizes = [64, 32], strides = [1, 1]} : vector<64x640xf32> to vector<64x32xf32>
    %10 = vector.extract_strided_slice %5 {offsets = [0, 512], sizes = [64, 32], strides = [1, 1]} : vector<64x640xf32> to vector<64x32xf32>
    %c0_5 = arith.constant 0 : index
    %c0_6 = arith.constant 0 : index
    %11 = vector.load %arg5[%c0_5, %c0_6] : memref<1x32xf32, #tpu.memory_space<vmem>>, vector<1x32xf32>
    %12 = vector.broadcast %6 : vector<64x1xf32> to vector<64x32xf32>
    %13 = vector.broadcast %11 : vector<1x32xf32> to vector<64x32xf32>
    %14 = arith.mulf %12, %13 : vector<64x32xf32>
    %15 = math.exp %14 : vector<64x32xf32>
    %16 = vector.broadcast %0 : f32 to vector<64x32xf32>
    %17 = arith.mulf %16, %15 : vector<64x32xf32>
    %c0_7 = arith.constant 0 : index
    %c0_8 = arith.constant 0 : index
    %18 = vector.load %arg6[%c0_7, %c0_8] : memref<2x32xf32, #tpu.memory_space<vmem>>, vector<1x32xf32>
    %c1 = arith.constant 1 : index
    %c0_9 = arith.constant 0 : index
    %19 = vector.load %arg6[%c1, %c0_9] : memref<2x32xf32, #tpu.memory_space<vmem>>, vector<1x32xf32>
    %cst_10 = arith.constant 5.000000e-01 : f32
    %20 = vector.broadcast %cst_10 : f32 to vector<64x32xf32>
    %21 = arith.mulf %20, %17 : vector<64x32xf32>
    %22 = vector.broadcast %18 : vector<1x32xf32> to vector<64x32xf32>
    %23 = arith.mulf %21, %22 : vector<64x32xf32>
    %cst_11 = arith.constant 1.000000e+00 : f32
    %24 = vector.broadcast %cst_11 : f32 to vector<64x32xf32>
    %25 = arith.subf %24, %23 : vector<64x32xf32>
    %cst_12 = arith.constant 0.000000e+00 : f32
    %26 = vector.broadcast %cst_12 : f32 to vector<64x32xf32>
    %27 = arith.subf %26, %21 : vector<64x32xf32>
    %28 = vector.broadcast %19 : vector<1x32xf32> to vector<64x32xf32>
    %29 = arith.mulf %27, %28 : vector<64x32xf32>
    %30 = arith.mulf %25, %25 : vector<64x32xf32>
    %31 = arith.mulf %29, %29 : vector<64x32xf32>
    %32 = arith.addf %30, %31 : vector<64x32xf32>
    %cst_13 = arith.constant 1.000000e+00 : f32
    %33 = vector.broadcast %cst_13 : f32 to vector<64x32xf32>
    %34 = arith.divf %33, %32 : vector<64x32xf32>
    %35 = arith.mulf %25, %34 : vector<64x32xf32>
    %cst_14 = arith.constant 0.000000e+00 : f32
    %36 = vector.broadcast %cst_14 : f32 to vector<64x32xf32>
    %37 = arith.subf %36, %29 : vector<64x32xf32>
    %38 = arith.mulf %37, %34 : vector<64x32xf32>
    %39 = vector.broadcast %18 : vector<1x32xf32> to vector<64x32xf32>
    %40 = arith.mulf %21, %39 : vector<64x32xf32>
    %cst_15 = arith.constant 1.000000e+00 : f32
    %41 = vector.broadcast %cst_15 : f32 to vector<64x32xf32>
    %42 = arith.addf %41, %40 : vector<64x32xf32>
    %43 = vector.broadcast %19 : vector<1x32xf32> to vector<64x32xf32>
    %44 = arith.mulf %21, %43 : vector<64x32xf32>
    %45 = arith.mulf %35, %42 : vector<64x32xf32>
    %46 = arith.mulf %38, %44 : vector<64x32xf32>
    %47 = arith.subf %45, %46 : vector<64x32xf32>
    %c0_16 = arith.constant 0 : index
    %c0_17 = arith.constant 0 : index
    %48 = vector.load %arg11[%c0_16, %c0_17] : memref<64x32xf32, #tpu.memory_space<vmem>>, vector<64x32xf32>
    tpu.vector_store %arg11[%c0_16, %c0_17], %47 {strides = array<i32>} : memref<64x32xf32, #tpu.memory_space<vmem>>, vector<64x32xf32>,
    %49 = arith.mulf %35, %44 : vector<64x32xf32>
    %50 = arith.mulf %38, %42 : vector<64x32xf32>
    %51 = arith.addf %49, %50 : vector<64x32xf32>
    %c0_18 = arith.constant 0 : index
    %c0_19 = arith.constant 0 : index
    %52 = vector.load %arg12[%c0_18, %c0_19] : memref<64x32xf32, #tpu.memory_space<vmem>>, vector<64x32xf32>
    tpu.vector_store %arg12[%c0_18, %c0_19], %51 {strides = array<i32>} : memref<64x32xf32, #tpu.memory_space<vmem>>, vector<64x32xf32>,
    %53 = arith.mulf %7, %2 : vector<64x32xf32>
    %cst_20 = arith.constant dense<0.000000e+00> : vector<64xf32>
    %54 = vector.multi_reduction <add>, %53, %cst_20 [1] : vector<64x32xf32> to vector<64xf32>
    %55 = vector.shape_cast %54 : vector<64xf32> to vector<64x1xf32>
    %56 = vector.broadcast %55 : vector<64x1xf32> to vector<64x32xf32>
    %57 = arith.mulf %7, %56 : vector<64x32xf32>
    %58 = arith.mulf %8, %2 : vector<64x32xf32>
    %cst_21 = arith.constant dense<0.000000e+00> : vector<64xf32>
    %59 = vector.multi_reduction <add>, %58, %cst_21 [1] : vector<64x32xf32> to vector<64xf32>
    %60 = vector.shape_cast %59 : vector<64xf32> to vector<64x1xf32>
    %61 = vector.broadcast %60 : vector<64x1xf32> to vector<64x32xf32>
    %62 = arith.mulf %8, %61 : vector<64x32xf32>
    %63 = arith.mulf %35, %17 : vector<64x32xf32>
    %64 = arith.mulf %38, %17 : vector<64x32xf32>
    %65 = arith.mulf %63, %57 : vector<64x32xf32>
    %66 = arith.mulf %64, %62 : vector<64x32xf32>
    %67 = arith.subf %65, %66 : vector<64x32xf32>
    %c0_22 = arith.constant 0 : index
    %c0_23 = arith.constant 0 : index
    %68 = vector.load %arg13[%c0_22, %c0_23] : memref<64x32xf32, #tpu.memory_space<vmem>>, vector<64x32xf32>
    tpu.vector_store %arg13[%c0_22, %c0_23], %67 {strides = array<i32>} : memref<64x32xf32, #tpu.memory_space<vmem>>, vector<64x32xf32>,
    %69 = arith.mulf %64, %57 : vector<64x32xf32>
    %70 = arith.mulf %63, %62 : vector<64x32xf32>
    %71 = arith.addf %69, %70 : vector<64x32xf32>
    %c0_24 = arith.constant 0 : index
    %c0_25 = arith.constant 0 : index
    %72 = vector.load %arg14[%c0_24, %c0_25] : memref<64x32xf32, #tpu.memory_space<vmem>>, vector<64x32xf32>
    tpu.vector_store %arg14[%c0_24, %c0_25], %71 {strides = array<i32>} : memref<64x32xf32, #tpu.memory_space<vmem>>, vector<64x32xf32>,
    %c0_26 = arith.constant 0 : index
    %c0_27 = arith.constant 0 : index
    %73 = vector.load %arg7[%c0_26, %c0_27] : memref<1x32xf32, #tpu.memory_space<vmem>>, vector<1x32xf32>
    %74 = vector.broadcast %73 : vector<1x32xf32> to vector<64x32xf32>
    %75 = arith.mulf %74, %2 : vector<64x32xf32>
    %c0_28 = arith.constant 0 : index
    %c0_29 = arith.constant 0 : index
    %c0_30 = arith.constant 0 : index
    %76 = vector.load %arg8[%c0_28, %c0_29, %c0_30] : memref<1x64x32xf32, #tpu.memory_space<vmem>>, vector<1x64x32xf32>
    %77 = vector.shape_cast %76 : vector<1x64x32xf32> to vector<64x32xf32>
    %78 = vector.shape_cast %75 : vector<64x32xf32> to vector<1x64x32xf32>
    tpu.vector_store %arg8[%c0_28, %c0_29, %c0_30], %78 {strides = array<i32>} : memref<1x64x32xf32, #tpu.memory_space<vmem>>, vector<1x64x32xf32>,
    %c0_i32 = arith.constant 0 : i32
    %79 = arith.cmpi eq, %arg1, %c0_i32 : i32
    %80 = arith.extui %79 : i1 to i32
    %c0_i32_31 = arith.constant 0 : i32
    %81 = arith.cmpi ne, %80, %c0_i32_31 : i32
    scf.if %81 {
      %cst_106 = arith.constant 0.000000e+00 : f32
      %281 = vector.broadcast %cst_106 : f32 to vector<8x32xf32>
      %c0_107 = arith.constant 0 : index
      %c0_108 = arith.constant 0 : index
      %c0_109 = arith.constant 0 : index
      %282 = vector.load %arg9[%c0_107, %c0_108, %c0_109] : memref<1x8x32xf32, #tpu.memory_space<vmem>>, vector<1x8x32xf32>
      %283 = vector.shape_cast %282 : vector<1x8x32xf32> to vector<8x32xf32>
      %284 = vector.shape_cast %281 : vector<8x32xf32> to vector<1x8x32xf32>
      tpu.vector_store %arg9[%c0_107, %c0_108, %c0_109], %284 {strides = array<i32>} : memref<1x8x32xf32, #tpu.memory_space<vmem>>, vector<1x8x32xf32>,
      %cst_110 = arith.constant 0.000000e+00 : f32
      %285 = vector.broadcast %cst_110 : f32 to vector<8x32xf32>
      %c0_111 = arith.constant 0 : index
      %c0_112 = arith.constant 0 : index
      %c0_113 = arith.constant 0 : index
      %286 = vector.load %arg10[%c0_111, %c0_112, %c0_113] : memref<1x8x32xf32, #tpu.memory_space<vmem>>, vector<1x8x32xf32>
      %287 = vector.shape_cast %286 : vector<1x8x32xf32> to vector<8x32xf32>
      %288 = vector.shape_cast %285 : vector<8x32xf32> to vector<1x8x32xf32>
      tpu.vector_store %arg10[%c0_111, %c0_112, %c0_113], %288 {strides = array<i32>} : memref<1x8x32xf32, #tpu.memory_space<vmem>>, vector<1x8x32xf32>,
    } else {
    }
    %c0_32 = arith.constant 0 : index
    %c0_33 = arith.constant 0 : index
    %c0_34 = arith.constant 0 : index
    %82 = vector.load %arg9[%c0_32, %c0_33, %c0_34] : memref<1x8x32xf32, #tpu.memory_space<vmem>>, vector<1x8x32xf32>
    %83 = vector.shape_cast %82 : vector<1x8x32xf32> to vector<8x32xf32>
    %c0_35 = arith.constant 0 : index
    %c0_36 = arith.constant 0 : index
    %c0_37 = arith.constant 0 : index
    %84 = vector.load %arg10[%c0_35, %c0_36, %c0_37] : memref<1x8x32xf32, #tpu.memory_space<vmem>>, vector<1x8x32xf32>
    %85 = vector.shape_cast %84 : vector<1x8x32xf32> to vector<8x32xf32>
    %c0_i32_38 = arith.constant 0 : i32
    %c64_i32 = arith.constant 64 : i32
    %86 = arith.muli %c0_i32_38, %c64_i32 : i32
    %87 = tpu.assume_multiple %86, 64 : i32
    %c0_i32_39 = arith.constant 0 : i32
    %88 = arith.addi %87, %c0_i32_39 : i32
    %89 = arith.index_cast %88 : i32 to index
    %c0_40 = arith.constant 0 : index
    %90 = vector.load %arg11[%89, %c0_40] : memref<64x32xf32, #tpu.memory_space<vmem>>, vector<8x32xf32>
    %91 = arith.index_cast %88 : i32 to index
    %c0_41 = arith.constant 0 : index
    %92 = vector.load %arg12[%91, %c0_41] : memref<64x32xf32, #tpu.memory_space<vmem>>, vector<8x32xf32>
    %93 = arith.index_cast %88 : i32 to index
    %c0_42 = arith.constant 0 : index
    %94 = vector.load %arg13[%93, %c0_42] : memref<64x32xf32, #tpu.memory_space<vmem>>, vector<8x32xf32>
    %95 = arith.index_cast %88 : i32 to index
    %c0_43 = arith.constant 0 : index
    %96 = vector.load %arg14[%95, %c0_43] : memref<64x32xf32, #tpu.memory_space<vmem>>, vector<8x32xf32>
    %97 = arith.mulf %90, %83 : vector<8x32xf32>
    %98 = arith.mulf %92, %85 : vector<8x32xf32>
    %99 = arith.subf %97, %98 : vector<8x32xf32>
    %100 = arith.addf %99, %94 : vector<8x32xf32>
    %101 = arith.mulf %92, %83 : vector<8x32xf32>
    %102 = arith.mulf %90, %85 : vector<8x32xf32>
    %103 = arith.addf %101, %102 : vector<8x32xf32>
    %104 = arith.addf %103, %96 : vector<8x32xf32>
    %105 = arith.index_cast %88 : i32 to index
    %c0_44 = arith.constant 0 : index
    %106 = vector.load %arg13[%105, %c0_44] : memref<64x32xf32, #tpu.memory_space<vmem>>, vector<8x32xf32>
    tpu.vector_store %arg13[%105, %c0_44], %100 {strides = array<i32>} : memref<64x32xf32, #tpu.memory_space<vmem>>, vector<8x32xf32>,
    %107 = arith.index_cast %88 : i32 to index
    %c0_45 = arith.constant 0 : index
    %108 = vector.load %arg14[%107, %c0_45] : memref<64x32xf32, #tpu.memory_space<vmem>>, vector<8x32xf32>
    tpu.vector_store %arg14[%107, %c0_45], %104 {strides = array<i32>} : memref<64x32xf32, #tpu.memory_space<vmem>>, vector<8x32xf32>,
    %c8_i32 = arith.constant 8 : i32
    %109 = arith.addi %87, %c8_i32 : i32
    %110 = arith.index_cast %109 : i32 to index
    %c0_46 = arith.constant 0 : index
    %111 = vector.load %arg11[%110, %c0_46] : memref<64x32xf32, #tpu.memory_space<vmem>>, vector<8x32xf32>
    %112 = arith.index_cast %109 : i32 to index
    %c0_47 = arith.constant 0 : index
    %113 = vector.load %arg12[%112, %c0_47] : memref<64x32xf32, #tpu.memory_space<vmem>>, vector<8x32xf32>
    %114 = arith.index_cast %109 : i32 to index
    %c0_48 = arith.constant 0 : index
    %115 = vector.load %arg13[%114, %c0_48] : memref<64x32xf32, #tpu.memory_space<vmem>>, vector<8x32xf32>
    %116 = arith.index_cast %109 : i32 to index
    %c0_49 = arith.constant 0 : index
    %117 = vector.load %arg14[%116, %c0_49] : memref<64x32xf32, #tpu.memory_space<vmem>>, vector<8x32xf32>
    %118 = arith.mulf %111, %100 : vector<8x32xf32>
    %119 = arith.mulf %113, %104 : vector<8x32xf32>
    %120 = arith.subf %118, %119 : vector<8x32xf32>
    %121 = arith.addf %120, %115 : vector<8x32xf32>
    %122 = arith.mulf %113, %100 : vector<8x32xf32>
    %123 = arith.mulf %111, %104 : vector<8x32xf32>
    %124 = arith.addf %122, %123 : vector<8x32xf32>
    %125 = arith.addf %124, %117 : vector<8x32xf32>
    %126 = arith.index_cast %109 : i32 to index
    %c0_50 = arith.constant 0 : index
    %127 = vector.load %arg13[%126, %c0_50] : memref<64x32xf32, #tpu.memory_space<vmem>>, vector<8x32xf32>
    tpu.vector_store %arg13[%126, %c0_50], %121 {strides = array<i32>} : memref<64x32xf32, #tpu.memory_space<vmem>>, vector<8x32xf32>,
    %128 = arith.index_cast %109 : i32 to index
    %c0_51 = arith.constant 0 : index
    %129 = vector.load %arg14[%128, %c0_51] : memref<64x32xf32, #tpu.memory_space<vmem>>, vector<8x32xf32>
    tpu.vector_store %arg14[%128, %c0_51], %125 {strides = array<i32>} : memref<64x32xf32, #tpu.memory_space<vmem>>, vector<8x32xf32>,
    %c16_i32 = arith.constant 16 : i32
    %130 = arith.addi %87, %c16_i32 : i32
    %131 = arith.index_cast %130 : i32 to index
    %c0_52 = arith.constant 0 : index
    %132 = vector.load %arg11[%131, %c0_52] : memref<64x32xf32, #tpu.memory_space<vmem>>, vector<8x32xf32>
    %133 = arith.index_cast %130 : i32 to index
    %c0_53 = arith.constant 0 : index
    %134 = vector.load %arg12[%133, %c0_53] : memref<64x32xf32, #tpu.memory_space<vmem>>, vector<8x32xf32>
    %135 = arith.index_cast %130 : i32 to index
    %c0_54 = arith.constant 0 : index
    %136 = vector.load %arg13[%135, %c0_54] : memref<64x32xf32, #tpu.memory_space<vmem>>, vector<8x32xf32>
    %137 = arith.index_cast %130 : i32 to index
    %c0_55 = arith.constant 0 : index
    %138 = vector.load %arg14[%137, %c0_55] : memref<64x32xf32, #tpu.memory_space<vmem>>, vector<8x32xf32>
    %139 = arith.mulf %132, %121 : vector<8x32xf32>
    %140 = arith.mulf %134, %125 : vector<8x32xf32>
    %141 = arith.subf %139, %140 : vector<8x32xf32>
    %142 = arith.addf %141, %136 : vector<8x32xf32>
    %143 = arith.mulf %134, %121 : vector<8x32xf32>
    %144 = arith.mulf %132, %125 : vector<8x32xf32>
    %145 = arith.addf %143, %144 : vector<8x32xf32>
    %146 = arith.addf %145, %138 : vector<8x32xf32>
    %147 = arith.index_cast %130 : i32 to index
    %c0_56 = arith.constant 0 : index
    %148 = vector.load %arg13[%147, %c0_56] : memref<64x32xf32, #tpu.memory_space<vmem>>, vector<8x32xf32>
    tpu.vector_store %arg13[%147, %c0_56], %142 {strides = array<i32>} : memref<64x32xf32, #tpu.memory_space<vmem>>, vector<8x32xf32>,
    %149 = arith.index_cast %130 : i32 to index
    %c0_57 = arith.constant 0 : index
    %150 = vector.load %arg14[%149, %c0_57] : memref<64x32xf32, #tpu.memory_space<vmem>>, vector<8x32xf32>
    tpu.vector_store %arg14[%149, %c0_57], %146 {strides = array<i32>} : memref<64x32xf32, #tpu.memory_space<vmem>>, vector<8x32xf32>,
    %c24_i32 = arith.constant 24 : i32
    %151 = arith.addi %87, %c24_i32 : i32
    %152 = arith.index_cast %151 : i32 to index
    %c0_58 = arith.constant 0 : index
    %153 = vector.load %arg11[%152, %c0_58] : memref<64x32xf32, #tpu.memory_space<vmem>>, vector<8x32xf32>
    %154 = arith.index_cast %151 : i32 to index
    %c0_59 = arith.constant 0 : index
    %155 = vector.load %arg12[%154, %c0_59] : memref<64x32xf32, #tpu.memory_space<vmem>>, vector<8x32xf32>
    %156 = arith.index_cast %151 : i32 to index
    %c0_60 = arith.constant 0 : index
    %157 = vector.load %arg13[%156, %c0_60] : memref<64x32xf32, #tpu.memory_space<vmem>>, vector<8x32xf32>
    %158 = arith.index_cast %151 : i32 to index
    %c0_61 = arith.constant 0 : index
    %159 = vector.load %arg14[%158, %c0_61] : memref<64x32xf32, #tpu.memory_space<vmem>>, vector<8x32xf32>
    %160 = arith.mulf %153, %142 : vector<8x32xf32>
    %161 = arith.mulf %155, %146 : vector<8x32xf32>
    %162 = arith.subf %160, %161 : vector<8x32xf32>
    %163 = arith.addf %162, %157 : vector<8x32xf32>
    %164 = arith.mulf %155, %142 : vector<8x32xf32>
    %165 = arith.mulf %153, %146 : vector<8x32xf32>
    %166 = arith.addf %164, %165 : vector<8x32xf32>
    %167 = arith.addf %166, %159 : vector<8x32xf32>
    %168 = arith.index_cast %151 : i32 to index
    %c0_62 = arith.constant 0 : index
    %169 = vector.load %arg13[%168, %c0_62] : memref<64x32xf32, #tpu.memory_space<vmem>>, vector<8x32xf32>
    tpu.vector_store %arg13[%168, %c0_62], %163 {strides = array<i32>} : memref<64x32xf32, #tpu.memory_space<vmem>>, vector<8x32xf32>,
    %170 = arith.index_cast %151 : i32 to index
    %c0_63 = arith.constant 0 : index
    %171 = vector.load %arg14[%170, %c0_63] : memref<64x32xf32, #tpu.memory_space<vmem>>, vector<8x32xf32>
    tpu.vector_store %arg14[%170, %c0_63], %167 {strides = array<i32>} : memref<64x32xf32, #tpu.memory_space<vmem>>, vector<8x32xf32>,
    %c32_i32 = arith.constant 32 : i32
    %172 = arith.addi %87, %c32_i32 : i32
    %173 = arith.index_cast %172 : i32 to index
    %c0_64 = arith.constant 0 : index
    %174 = vector.load %arg11[%173, %c0_64] : memref<64x32xf32, #tpu.memory_space<vmem>>, vector<8x32xf32>
    %175 = arith.index_cast %172 : i32 to index
    %c0_65 = arith.constant 0 : index
    %176 = vector.load %arg12[%175, %c0_65] : memref<64x32xf32, #tpu.memory_space<vmem>>, vector<8x32xf32>
    %177 = arith.index_cast %172 : i32 to index
    %c0_66 = arith.constant 0 : index
    %178 = vector.load %arg13[%177, %c0_66] : memref<64x32xf32, #tpu.memory_space<vmem>>, vector<8x32xf32>
    %179 = arith.index_cast %172 : i32 to index
    %c0_67 = arith.constant 0 : index
    %180 = vector.load %arg14[%179, %c0_67] : memref<64x32xf32, #tpu.memory_space<vmem>>, vector<8x32xf32>
    %181 = arith.mulf %174, %163 : vector<8x32xf32>
    %182 = arith.mulf %176, %167 : vector<8x32xf32>
    %183 = arith.subf %181, %182 : vector<8x32xf32>
    %184 = arith.addf %183, %178 : vector<8x32xf32>
    %185 = arith.mulf %176, %163 : vector<8x32xf32>
    %186 = arith.mulf %174, %167 : vector<8x32xf32>
    %187 = arith.addf %185, %186 : vector<8x32xf32>
    %188 = arith.addf %187, %180 : vector<8x32xf32>
    %189 = arith.index_cast %172 : i32 to index
    %c0_68 = arith.constant 0 : index
    %190 = vector.load %arg13[%189, %c0_68] : memref<64x32xf32, #tpu.memory_space<vmem>>, vector<8x32xf32>
    tpu.vector_store %arg13[%189, %c0_68], %184 {strides = array<i32>} : memref<64x32xf32, #tpu.memory_space<vmem>>, vector<8x32xf32>,
    %191 = arith.index_cast %172 : i32 to index
    %c0_69 = arith.constant 0 : index
    %192 = vector.load %arg14[%191, %c0_69] : memref<64x32xf32, #tpu.memory_space<vmem>>, vector<8x32xf32>
    tpu.vector_store %arg14[%191, %c0_69], %188 {strides = array<i32>} : memref<64x32xf32, #tpu.memory_space<vmem>>, vector<8x32xf32>,
    %c40_i32 = arith.constant 40 : i32
    %193 = arith.addi %87, %c40_i32 : i32
    %194 = arith.index_cast %193 : i32 to index
    %c0_70 = arith.constant 0 : index
    %195 = vector.load %arg11[%194, %c0_70] : memref<64x32xf32, #tpu.memory_space<vmem>>, vector<8x32xf32>
    %196 = arith.index_cast %193 : i32 to index
    %c0_71 = arith.constant 0 : index
    %197 = vector.load %arg12[%196, %c0_71] : memref<64x32xf32, #tpu.memory_space<vmem>>, vector<8x32xf32>
    %198 = arith.index_cast %193 : i32 to index
    %c0_72 = arith.constant 0 : index
    %199 = vector.load %arg13[%198, %c0_72] : memref<64x32xf32, #tpu.memory_space<vmem>>, vector<8x32xf32>
    %200 = arith.index_cast %193 : i32 to index
    %c0_73 = arith.constant 0 : index
    %201 = vector.load %arg14[%200, %c0_73] : memref<64x32xf32, #tpu.memory_space<vmem>>, vector<8x32xf32>
    %202 = arith.mulf %195, %184 : vector<8x32xf32>
    %203 = arith.mulf %197, %188 : vector<8x32xf32>
    %204 = arith.subf %202, %203 : vector<8x32xf32>
    %205 = arith.addf %204, %199 : vector<8x32xf32>
    %206 = arith.mulf %197, %184 : vector<8x32xf32>
    %207 = arith.mulf %195, %188 : vector<8x32xf32>
    %208 = arith.addf %206, %207 : vector<8x32xf32>
    %209 = arith.addf %208, %201 : vector<8x32xf32>
    %210 = arith.index_cast %193 : i32 to index
    %c0_74 = arith.constant 0 : index
    %211 = vector.load %arg13[%210, %c0_74] : memref<64x32xf32, #tpu.memory_space<vmem>>, vector<8x32xf32>
    tpu.vector_store %arg13[%210, %c0_74], %205 {strides = array<i32>} : memref<64x32xf32, #tpu.memory_space<vmem>>, vector<8x32xf32>,
    %212 = arith.index_cast %193 : i32 to index
    %c0_75 = arith.constant 0 : index
    %213 = vector.load %arg14[%212, %c0_75] : memref<64x32xf32, #tpu.memory_space<vmem>>, vector<8x32xf32>
    tpu.vector_store %arg14[%212, %c0_75], %209 {strides = array<i32>} : memref<64x32xf32, #tpu.memory_space<vmem>>, vector<8x32xf32>,
    %c48_i32 = arith.constant 48 : i32
    %214 = arith.addi %87, %c48_i32 : i32
    %215 = arith.index_cast %214 : i32 to index
    %c0_76 = arith.constant 0 : index
    %216 = vector.load %arg11[%215, %c0_76] : memref<64x32xf32, #tpu.memory_space<vmem>>, vector<8x32xf32>
    %217 = arith.index_cast %214 : i32 to index
    %c0_77 = arith.constant 0 : index
    %218 = vector.load %arg12[%217, %c0_77] : memref<64x32xf32, #tpu.memory_space<vmem>>, vector<8x32xf32>
    %219 = arith.index_cast %214 : i32 to index
    %c0_78 = arith.constant 0 : index
    %220 = vector.load %arg13[%219, %c0_78] : memref<64x32xf32, #tpu.memory_space<vmem>>, vector<8x32xf32>
    %221 = arith.index_cast %214 : i32 to index
    %c0_79 = arith.constant 0 : index
    %222 = vector.load %arg14[%221, %c0_79] : memref<64x32xf32, #tpu.memory_space<vmem>>, vector<8x32xf32>
    %223 = arith.mulf %216, %205 : vector<8x32xf32>
    %224 = arith.mulf %218, %209 : vector<8x32xf32>
    %225 = arith.subf %223, %224 : vector<8x32xf32>
    %226 = arith.addf %225, %220 : vector<8x32xf32>
    %227 = arith.mulf %218, %205 : vector<8x32xf32>
    %228 = arith.mulf %216, %209 : vector<8x32xf32>
    %229 = arith.addf %227, %228 : vector<8x32xf32>
    %230 = arith.addf %229, %222 : vector<8x32xf32>
    %231 = arith.index_cast %214 : i32 to index
    %c0_80 = arith.constant 0 : index
    %232 = vector.load %arg13[%231, %c0_80] : memref<64x32xf32, #tpu.memory_space<vmem>>, vector<8x32xf32>
    tpu.vector_store %arg13[%231, %c0_80], %226 {strides = array<i32>} : memref<64x32xf32, #tpu.memory_space<vmem>>, vector<8x32xf32>,
    %233 = arith.index_cast %214 : i32 to index
    %c0_81 = arith.constant 0 : index
    %234 = vector.load %arg14[%233, %c0_81] : memref<64x32xf32, #tpu.memory_space<vmem>>, vector<8x32xf32>
    tpu.vector_store %arg14[%233, %c0_81], %230 {strides = array<i32>} : memref<64x32xf32, #tpu.memory_space<vmem>>, vector<8x32xf32>,
    %c56_i32 = arith.constant 56 : i32
    %235 = arith.addi %87, %c56_i32 : i32
    %236 = arith.index_cast %235 : i32 to index
    %c0_82 = arith.constant 0 : index
    %237 = vector.load %arg11[%236, %c0_82] : memref<64x32xf32, #tpu.memory_space<vmem>>, vector<8x32xf32>
    %238 = arith.index_cast %235 : i32 to index
    %c0_83 = arith.constant 0 : index
    %239 = vector.load %arg12[%238, %c0_83] : memref<64x32xf32, #tpu.memory_space<vmem>>, vector<8x32xf32>
    %240 = arith.index_cast %235 : i32 to index
    %c0_84 = arith.constant 0 : index
    %241 = vector.load %arg13[%240, %c0_84] : memref<64x32xf32, #tpu.memory_space<vmem>>, vector<8x32xf32>
    %242 = arith.index_cast %235 : i32 to index
    %c0_85 = arith.constant 0 : index
    %243 = vector.load %arg14[%242, %c0_85] : memref<64x32xf32, #tpu.memory_space<vmem>>, vector<8x32xf32>
    %244 = arith.mulf %237, %226 : vector<8x32xf32>
    %245 = arith.mulf %239, %230 : vector<8x32xf32>
    %246 = arith.subf %244, %245 : vector<8x32xf32>
    %247 = arith.addf %246, %241 : vector<8x32xf32>
    %248 = arith.mulf %239, %226 : vector<8x32xf32>
    %249 = arith.mulf %237, %230 : vector<8x32xf32>
    %250 = arith.addf %248, %249 : vector<8x32xf32>
    %251 = arith.addf %250, %243 : vector<8x32xf32>
    %252 = arith.index_cast %235 : i32 to index
    %c0_86 = arith.constant 0 : index
    %253 = vector.load %arg13[%252, %c0_86] : memref<64x32xf32, #tpu.memory_space<vmem>>, vector<8x32xf32>
    tpu.vector_store %arg13[%252, %c0_86], %247 {strides = array<i32>} : memref<64x32xf32, #tpu.memory_space<vmem>>, vector<8x32xf32>,
    %254 = arith.index_cast %235 : i32 to index
    %c0_87 = arith.constant 0 : index
    %255 = vector.load %arg14[%254, %c0_87] : memref<64x32xf32, #tpu.memory_space<vmem>>, vector<8x32xf32>
    tpu.vector_store %arg14[%254, %c0_87], %251 {strides = array<i32>} : memref<64x32xf32, #tpu.memory_space<vmem>>, vector<8x32xf32>,
    %c1_i32 = arith.constant 1 : i32
    %c0_88 = arith.constant 0 : index
    %c0_89 = arith.constant 0 : index
    %c0_90 = arith.constant 0 : index
    %256 = vector.load %arg9[%c0_88, %c0_89, %c0_90] : memref<1x8x32xf32, #tpu.memory_space<vmem>>, vector<1x8x32xf32>
    %257 = vector.shape_cast %256 : vector<1x8x32xf32> to vector<8x32xf32>
    %258 = vector.shape_cast %247 : vector<8x32xf32> to vector<1x8x32xf32>
    tpu.vector_store %arg9[%c0_88, %c0_89, %c0_90], %258 {strides = array<i32>} : memref<1x8x32xf32, #tpu.memory_space<vmem>>, vector<1x8x32xf32>,
    %c0_91 = arith.constant 0 : index
    %c0_92 = arith.constant 0 : index
    %c0_93 = arith.constant 0 : index
    %259 = vector.load %arg10[%c0_91, %c0_92, %c0_93] : memref<1x8x32xf32, #tpu.memory_space<vmem>>, vector<1x8x32xf32>
    %260 = vector.shape_cast %259 : vector<1x8x32xf32> to vector<8x32xf32>
    %261 = vector.shape_cast %251 : vector<8x32xf32> to vector<1x8x32xf32>
    tpu.vector_store %arg10[%c0_91, %c0_92, %c0_93], %261 {strides = array<i32>} : memref<1x8x32xf32, #tpu.memory_space<vmem>>, vector<1x8x32xf32>,
    %c0_94 = arith.constant 0 : index
    %c0_95 = arith.constant 0 : index
    %262 = vector.load %arg13[%c0_94, %c0_95] : memref<64x32xf32, #tpu.memory_space<vmem>>, vector<64x32xf32>
    %c0_96 = arith.constant 0 : index
    %c0_97 = arith.constant 0 : index
    %263 = vector.load %arg14[%c0_96, %c0_97] : memref<64x32xf32, #tpu.memory_space<vmem>>, vector<64x32xf32>
    %c0_98 = arith.constant 0 : index
    %c0_99 = arith.constant 0 : index
    %c0_100 = arith.constant 0 : index
    %264 = vector.load %arg8[%c0_98, %c0_99, %c0_100] : memref<1x64x32xf32, #tpu.memory_space<vmem>>, vector<1x64x32xf32>
    %265 = vector.shape_cast %264 : vector<1x64x32xf32> to vector<64x32xf32>
    %266 = arith.mulf %9, %262 : vector<64x32xf32>
    %cst_101 = arith.constant dense<0.000000e+00> : vector<64xf32>
    %267 = vector.multi_reduction <add>, %266, %cst_101 [1] : vector<64x32xf32> to vector<64xf32>
    %268 = vector.shape_cast %267 : vector<64xf32> to vector<64x1xf32>
    %269 = vector.broadcast %268 : vector<64x1xf32> to vector<64x32xf32>
    %270 = arith.mulf %9, %269 : vector<64x32xf32>
    %271 = arith.addf %265, %270 : vector<64x32xf32>
    %272 = arith.mulf %10, %263 : vector<64x32xf32>
    %cst_102 = arith.constant dense<0.000000e+00> : vector<64xf32>
    %273 = vector.multi_reduction <add>, %272, %cst_102 [1] : vector<64x32xf32> to vector<64xf32>
    %274 = vector.shape_cast %273 : vector<64xf32> to vector<64x1xf32>
    %275 = vector.broadcast %274 : vector<64x1xf32> to vector<64x32xf32>
    %276 = arith.mulf %10, %275 : vector<64x32xf32>
    %277 = arith.subf %271, %276 : vector<64x32xf32>
    %c0_103 = arith.constant 0 : index
    %c0_104 = arith.constant 0 : index
    %c0_105 = arith.constant 0 : index
    %278 = vector.load %arg8[%c0_103, %c0_104, %c0_105] : memref<1x64x32xf32, #tpu.memory_space<vmem>>, vector<1x64x32xf32>
    %279 = vector.shape_cast %278 : vector<1x64x32xf32> to vector<64x32xf32>
    %280 = vector.shape_cast %277 : vector<64x32xf32> to vector<1x64x32xf32>
    tpu.vector_store %arg8[%c0_103, %c0_104, %c0_105], %280 {strides = array<i32>} : memref<1x64x32xf32, #tpu.memory_space<vmem>>, vector<1x64x32xf32>,
    return
  }
  func.func @transform_0(%arg0: i32, %arg1: i32, %arg2: memref<1xf32, #tpu.memory_space<smem>>) -> (i32, i32, i32) {
    %c0_i32 = arith.constant 0 : i32
    %c0_i32_0 = arith.constant 0 : i32
    return %arg0, %arg1, %c0_i32 : i32, i32, i32
  }
  func.func @transform_1(%arg0: i32, %arg1: i32, %arg2: memref<1xf32, #tpu.memory_space<smem>>) -> (i32, i32) {
    %c0_i32 = arith.constant 0 : i32
    %c0_i32_0 = arith.constant 0 : i32
    %c0_i32_1 = arith.constant 0 : i32
    return %c0_i32, %c0_i32_0 : i32, i32
  }
  func.func @transform_2(%arg0: i32, %arg1: i32, %arg2: memref<1xf32, #tpu.memory_space<smem>>) -> (i32, i32) {
    %c0_i32 = arith.constant 0 : i32
    %c0_i32_0 = arith.constant 0 : i32
    %c0_i32_1 = arith.constant 0 : i32
    return %c0_i32, %c0_i32_0 : i32, i32
  }
  func.func @transform_3(%arg0: i32, %arg1: i32, %arg2: memref<1xf32, #tpu.memory_space<smem>>) -> (i32, i32) {
    %c0_i32 = arith.constant 0 : i32
    %c0_i32_0 = arith.constant 0 : i32
    %c0_i32_1 = arith.constant 0 : i32
    return %c0_i32, %c0_i32_0 : i32, i32
  }
  func.func @transform_4(%arg0: i32, %arg1: i32, %arg2: memref<1xf32, #tpu.memory_space<smem>>) -> (i32, i32) {
    %c0_i32 = arith.constant 0 : i32
    %c0_i32_0 = arith.constant 0 : i32
    %c0_i32_1 = arith.constant 0 : i32
    return %c0_i32, %c0_i32_0 : i32, i32
  }
  func.func @transform_5(%arg0: i32, %arg1: i32, %arg2: memref<1xf32, #tpu.memory_space<smem>>) -> (i32, i32, i32) {
    %c0_i32 = arith.constant 0 : i32
    %c0_i32_0 = arith.constant 0 : i32
    return %arg0, %arg1, %c0_i32 : i32, i32, i32
  }
  func.func @transform_6(%arg0: i32, %arg1: i32, %arg2: memref<1xf32, #tpu.memory_space<smem>>) -> (i32, i32, i32) {
    %c0_i32 = arith.constant 0 : i32
    %c0_i32_0 = arith.constant 0 : i32
    %c0_i32_1 = arith.constant 0 : i32
    return %arg0, %c0_i32, %c0_i32_0 : i32, i32, i32
  }
  func.func @transform_7(%arg0: i32, %arg1: i32, %arg2: memref<1xf32, #tpu.memory_space<smem>>) -> (i32, i32, i32) {
    %c0_i32 = arith.constant 0 : i32
    %c0_i32_0 = arith.constant 0 : i32
    %c0_i32_1 = arith.constant 0 : i32
    return %arg0, %c0_i32, %c0_i32_0 : i32, i32, i32
  }
}

</mosaic_0001>

<llo_original>
// kernel: tpu_custom_call.1
$region0: #{tpu_custom_call.1}
  #allocation0 [shape = 'u32[]', space=smem, size = 0x4, offset = 0x4, fixed_abs, tag = 'smem constant byte address 0x4 - core index']
  #allocation1 [shape = 'u32[144,128]{1,0:T(1,128)}', space=vmem, size = 0x12000, scoped, tag = 'internal scratch']
  #allocation2 [shape = 'f32[64,32]{1,0:T(8,128)}', space=vmem, size = 0x8000, scoped, tag = 'scratch operand']
  #allocation3 [shape = 'f32[64,32]{1,0:T(8,128)}', space=vmem, size = 0x8000, scoped, tag = 'scratch operand']
  #allocation4 [shape = 'f32[64,32]{1,0:T(8,128)}', space=vmem, size = 0x8000, scoped, tag = 'scratch operand']
  #allocation5 [shape = 'f32[64,32]{1,0:T(8,128)}', space=vmem, size = 0x8000, scoped, tag = 'scratch operand']
  #allocation6 [shape = 's32[1]{0}', space=sflag, size = 0x4, scoped, tag = 'scoped memory for tpu_custom_call.1']
  #allocation7 [shape = 'f32[1]{0:T(128)S(6)}', space=smem, size = 0x200, scoped, tag = 'prefetched SMEM operand 0']
  %s0 = inlined_call_operand.<no memory space> [shape: f32[1], index: 0, kind: input, shape index: {}]
  %s1 = inlined_call_operand.vmem [shape: f32[1,64,32], index: 1, kind: input, shape index: {}]
  %s2 = inlined_call_operand.vmem [shape: bf16[32,640], index: 2, kind: input, shape index: {}]
  %s3 = inlined_call_operand.vmem [shape: f32[1,32], index: 3, kind: input, shape index: {}]
  %s4 = inlined_call_operand.vmem [shape: f32[2,32], index: 4, kind: input, shape index: {}]
  %s5 = inlined_call_operand.vmem [shape: f32[1,32], index: 5, kind: input, shape index: {}]
  %s6 = inlined_call_operand.vmem [shape: f32[1,64,32], index: 6, kind: output, shape index: {0}]
  %s7 = inlined_call_operand.hbm [shape: f32[1,8,32], index: 7, kind: output, shape index: {1}]
  %s8 = inlined_call_operand.hbm [shape: f32[1,8,32], index: 8, kind: output, shape index: {2}]
  %9 = xla_tuple %s6, %s7, %s8
  %s10 = sld [smem:[#allocation0]]
  $region50: #{tpu_custom_call.1} parent=0
    _
  %s12 = ssub.s32 1, %s10
  %s13 = scalar_select 0, %s12, %s10
  %14 = sst [smem:[#allocation7]] %s0
  $region1: #{tpu_custom_call.1} parent=0
    #allocation8 [shape = 'u8[4096]{0}', space=vmem, size = 0x1000, scoped, tag = 'output window, operand 1, single buffered']
    #allocation9 [shape = 's32[1]{0}', space=sflag, size = 0x4, scoped, tag = 'scoped memory for tpu_custom_call.1']
    #allocation10 [shape = 'u8[4096]{0}', space=vmem, size = 0x1000, scoped, tag = 'output window, operand 2, single buffered']
    #allocation11 [shape = 's32[1]{0}', space=sflag, size = 0x4, scoped, tag = 'scoped memory for tpu_custom_call.1']
    %15 = vsyncpa [#allocation9], 0
    %16 = vsyncpa [#allocation11], 0
    // Predicated region
    $region2: #{tpu_custom_call.1} parent=1 // pred_check
      _
    $region3: #{tpu_custom_call.1} parent=1 // pred_check_branch
      %18 = sbr.rel (0) target = $region5
    $region4: #{tpu_custom_call.1} parent=1 // pred_region
      _
    $region5: #{tpu_custom_call.1} parent=1 // pred_fallthru
      _
    // Predicated region
    $region6: #{tpu_custom_call.1} parent=1 // pred_check
      _
    $region7: #{tpu_custom_call.1} parent=1 // pred_check_branch
      %20 = sbr.rel (0) target = $region9
    $region8: #{tpu_custom_call.1} parent=1 // pred_region
      _
    $region9: #{tpu_custom_call.1} parent=1 // pred_fallthru
      _
    // Predicated region
    $region10: #{tpu_custom_call.1} parent=1 // pred_check
      _
    $region11: #{tpu_custom_call.1} parent=1 // pred_check_branch
      %22 = sbr.rel (0) target = $region13
    $region12: #{tpu_custom_call.1} parent=1 // pred_region
      _
    $region13: #{tpu_custom_call.1} parent=1 // pred_fallthru
      _
    // Predicated region
    $region14: #{tpu_custom_call.1} parent=1 // pred_check
      _
    $region15: #{tpu_custom_call.1} parent=1 // pred_check_branch
      %24 = sbr.rel (0) target = $region17
    $region16: #{tpu_custom_call.1} parent=1 // pred_region
      _
    $region17: #{tpu_custom_call.1} parent=1 // pred_fallthru
      _
    // Predicated region
    $region18: #{tpu_custom_call.1} parent=1 // pred_check
      _
    $region19: #{tpu_custom_call.1} parent=1 // pred_check_branch
      %26 = sbr.rel (0) target = $region21
    $region20: #{tpu_custom_call.1} parent=1 // pred_region
      _
    $region21: #{tpu_custom_call.1} parent=1 // pred_fallthru
      _
    %s28 = sld [smem:[#allocation7]]
    %v29 = vld [vmem:[%s1] sm:$0xff]
    %v30 = vld [vmem:[%s1 + $0x8] sm:$0xff]
    %v31 = vld [vmem:[%s1 + $0x10] sm:$0xff]
    %v32 = vld [vmem:[%s1 + $0x18] sm:$0xff]
    %v33 = vld [vmem:[%s1 + $0x20] sm:$0xff]
    %v34 = vld [vmem:[%s1 + $0x28] sm:$0xff]
    %v35 = vld [vmem:[%s1 + $0x30] sm:$0xff]
    %v36 = vld [vmem:[%s1 + $0x38] sm:$0xff]
    %v37 = vpack.c.bf16 %v30, %v29
    %v38 = vpack.c.bf16 %v32, %v31
    %v39 = vpack.c.bf16 %v34, %v33
    %v40 = vpack.c.bf16 %v36, %v35
    %v41 = vld [vmem:[%s2] sm:$0xff]
    %v42 = vld [vmem:[%s2 + $0x8] sm:$0xff]
    %v43 = vld [vmem:[%s2 + $0x10] sm:$0xf]
    %v44 = vld [vmem:[%s2 + $0x14] sm:$0xff]
    %v45 = vld [vmem:[%s2 + $0x1c] sm:$0xff]
    %v46 = vld [vmem:[%s2 + $0x24] sm:$0xf]
    %v47 = vld [vmem:[%s2 + $0x28] sm:$0xff]
    %v48 = vld [vmem:[%s2 + $0x30] sm:$0xff]
    %v49 = vld [vmem:[%s2 + $0x38] sm:$0xf]
    %v50 = vld [vmem:[%s2 + $0x3c] sm:$0xff]
    %v51 = vld [vmem:[%s2 + $0x44] sm:$0xff]
    %v52 = vld [vmem:[%s2 + $0x4c] sm:$0xf]
    %v65 = vunpack.c.l.b16 %v41
    %v66 = vunpack.c.h.b16 %v41
    %v67 = vunpack.c.l.b16 %v42
    %v68 = vunpack.c.h.b16 %v42
    %v69 = vunpack.c.l.b16 %v43
    %v70 = vunpack.c.l.b16 %v44
    %v71 = vunpack.c.h.b16 %v44
    %v72 = vunpack.c.l.b16 %v45
    %v73 = vunpack.c.h.b16 %v45
    %v74 = vunpack.c.l.b16 %v46
    %v75 = vunpack.c.l.b16 %v47
    %v76 = vunpack.c.h.b16 %v47
    %v77 = vunpack.c.l.b16 %v48
    %v78 = vunpack.c.h.b16 %v48
    %v79 = vunpack.c.l.b16 %v49
    %v80 = vunpack.c.l.b16 %v50
    %v81 = vunpack.c.h.b16 %v50
    %v82 = vunpack.c.l.b16 %v51
    %v83 = vunpack.c.h.b16 %v51
    %v84 = vunpack.c.l.b16 %v52
    %v85 = vpack.c.b16 %v70, %v65
    %v86 = vpack.c.b16 %v71, %v66
    %v87 = vpack.c.b16 %v72, %v67
    %v88 = vpack.c.b16 %v73, %v68
    %v89 = vpack.c.b16 %v74, %v69
    %v90 = vpack.c.b16 %v80, %v75
    %v91 = vpack.c.b16 %v81, %v76
    %v92 = vpack.c.b16 %v82, %v77
    %v93 = vpack.c.b16 %v83, %v78
    %v94 = vpack.c.b16 %v84, %v79
    %vm105 = vcmask 261120
    %v107 = vsel %vm105, %v37, 0
    %v110 = vsel %vm105, %v38, 0
    %v113 = vsel %vm105, %v39, 0
    %v116 = vsel %vm105, %v40, 0
    %118 = vmatprep.subr.bf16.mxu0 %v86
    %119 = vmatpush1.bf16.msra.mxu0 %v85
    %120 = vmatprep.subr.bf16.mxu0 %v91
    %121 = vmatpush1.bf16.msra.mxu0 %v90
    %122 = vmatprep.subr.bf16.mxu0 0
    %123 = vmatpush1.bf16.msra.mxu0 0
    %124 = vmatprep.subr.bf16.mxu0 0
    %125 = vmatpush1.bf16.msra.mxu0 0
    %126 = vmatprep.subr.bf16.mxu0 0
    %127 = vmatpush1.bf16.msra.mxu0 0
    %128 = vmatprep.subr.bf16.mxu0 0
    %129 = vmatpush1.bf16.msra.mxu0 0
    %130 = vmatprep.subr.bf16.mxu0 0
    %131 = vmatpush1.bf16.msra.mxu0 0
    %132 = vmatprep.subr.bf16.mxu0 0
    %133 = vmatpush1.bf16.msra.mxu0 0
    %134 = vmatprep.subr.bf16.mxu0 0
    %135 = vmatpush1.bf16.msra.mxu0 0
    %136 = vmatprep.subr.bf16.mxu0 0
    %137 = vmatpush1.bf16.msra.mxu0 0
    %138 = vmatprep.subr.bf16.mxu0 0
    %139 = vmatpush1.bf16.msra.mxu0 0
    %140 = vmatprep.subr.bf16.mxu0 0
    %141 = vmatpush1.bf16.msra.mxu0 0
    %142 = vmatprep.subr.bf16.mxu0 0
    %143 = vmatpush1.bf16.msra.mxu0 0
    %144 = vmatprep.subr.bf16.mxu0 0
    %145 = vmatpush1.bf16.msra.mxu0 0
    %146 = vmatprep.subr.bf16.mxu0 0
    %147 = vmatpush1.bf16.msra.mxu0 0
    %148 = vmatprep.subr.bf16.mxu0 0
    %149 = vmatpush1.bf16.msra.mxu0 0
    %150 = vmatprep.mubr.bf16.mxu0 0
    %151 = vmatmul.mubr.bf16.gmra.mrb[0].mxu0 %v107
    %v152 = vpop.f32.mrb[0].mxu0
    %v153 = vadd.f32 0.0, %v152
    %v154 = vpop.f32.mrb[0].mxu0
    %v155 = vadd.f32 0.0, %v154
    %v156 = vpop.f32.mrb[0].mxu0
    %v157 = vadd.f32 0.0, %v156
    %v158 = vpop.f32.mrb[0].mxu0
    %v159 = vadd.f32 0.0, %v158
    %160 = vmatprep.mubr.bf16.mxu0 0
    %161 = vmatmul.mubr.bf16.gmra.mrb[0].mxu0 %v110
    %v162 = vpop.f32.mrb[0].mxu0
    %v163 = vadd.f32 0.0, %v162
    %v164 = vpop.f32.mrb[0].mxu0
    %v165 = vadd.f32 0.0, %v164
    %v166 = vpop.f32.mrb[0].mxu0
    %v167 = vadd.f32 0.0, %v166
    %v168 = vpop.f32.mrb[0].mxu0
    %v169 = vadd.f32 0.0, %v168
    %170 = vmatprep.mubr.bf16.mxu0 0
    %171 = vmatmul.mubr.bf16.gmra.mrb[0].mxu0 %v113
    %v172 = vpop.f32.mrb[0].mxu0
    %v173 = vadd.f32 0.0, %v172
    %v174 = vpop.f32.mrb[0].mxu0
    %v175 = vadd.f32 0.0, %v174
    %v176 = vpop.f32.mrb[0].mxu0
    %v177 = vadd.f32 0.0, %v176
    %v178 = vpop.f32.mrb[0].mxu0
    %v179 = vadd.f32 0.0, %v178
    %180 = vmatprep.mubr.bf16.mxu0 0
    %181 = vmatmul.mubr.bf16.gmra.mrb[0].mxu0 %v116
    %v182 = vpop.f32.mrb[0].mxu0
    %v183 = vadd.f32 0.0, %v182
    %v184 = vpop.f32.mrb[0].mxu0
    %v185 = vadd.f32 0.0, %v184
    %v186 = vpop.f32.mrb[0].mxu0
    %v187 = vadd.f32 0.0, %v186
    %v188 = vpop.f32.mrb[0].mxu0
    %v189 = vadd.f32 0.0, %v188
    %190 = vdwg.mxu0
    %191 = vmatprep.subr.bf16.mxu0 %v88
    %192 = vmatpush1.bf16.msra.mxu0 %v87
    %193 = vmatprep.subr.bf16.mxu0 %v93
    %194 = vmatpush1.bf16.msra.mxu0 %v92
    %195 = vmatprep.subr.bf16.mxu0 0
    %196 = vmatpush1.bf16.msra.mxu0 0
    %197 = vmatprep.subr.bf16.mxu0 0
    %198 = vmatpush1.bf16.msra.mxu0 0
    %199 = vmatprep.subr.bf16.mxu0 0
    %200 = vmatpush1.bf16.msra.mxu0 0
    %201 = vmatprep.subr.bf16.mxu0 0
    %202 = vmatpush1.bf16.msra.mxu0 0
    %203 = vmatprep.subr.bf16.mxu0 0
    %204 = vmatpush1.bf16.msra.mxu0 0
    %205 = vmatprep.subr.bf16.mxu0 0
    %206 = vmatpush1.bf16.msra.mxu0 0
    %207 = vmatprep.subr.bf16.mxu0 0
    %208 = vmatpush1.bf16.msra.mxu0 0
    %209 = vmatprep.subr.bf16.mxu0 0
    %210 = vmatpush1.bf16.msra.mxu0 0
    %211 = vmatprep.subr.bf16.mxu0 0
    %212 = vmatpush1.bf16.msra.mxu0 0
    %213 = vmatprep.subr.bf16.mxu0 0
    %214 = vmatpush1.bf16.msra.mxu0 0
    %215 = vmatprep.subr.bf16.mxu0 0
    %216 = vmatpush1.bf16.msra.mxu0 0
    %217 = vmatprep.subr.bf16.mxu0 0
    %218 = vmatpush1.bf16.msra.mxu0 0
    %219 = vmatprep.subr.bf16.mxu0 0
    %220 = vmatpush1.bf16.msra.mxu0 0
    %221 = vmatprep.subr.bf16.mxu0 0
    %222 = vmatpush1.bf16.msra.mxu0 0
    %223 = vmatprep.mubr.bf16.mxu0 0
    %224 = vmatmul.mubr.bf16.gmra.mrb[0].mxu0 %v107
    %v225 = vpop.f32.mrb[0].mxu0
    %v226 = vadd.f32 0.0, %v225
    %v227 = vpop.f32.mrb[0].mxu0
    %v228 = vadd.f32 0.0, %v227
    %v229 = vpop.f32.mrb[0].mxu0
    %v230 = vadd.f32 0.0, %v229
    %v231 = vpop.f32.mrb[0].mxu0
    %v232 = vadd.f32 0.0, %v231
    %233 = vmatprep.mubr.bf16.mxu0 0
    %234 = vmatmul.mubr.bf16.gmra.mrb[0].mxu0 %v110
    %v235 = vpop.f32.mrb[0].mxu0
    %v236 = vadd.f32 0.0, %v235
    %v237 = vpop.f32.mrb[0].mxu0
    %v238 = vadd.f32 0.0, %v237
    %v239 = vpop.f32.mrb[0].mxu0
    %v240 = vadd.f32 0.0, %v239
    %v241 = vpop.f32.mrb[0].mxu0
    %v242 = vadd.f32 0.0, %v241
    %243 = vmatprep.mubr.bf16.mxu0 0
    %244 = vmatmul.mubr.bf16.gmra.mrb[0].mxu0 %v113
    %v245 = vpop.f32.mrb[0].mxu0
    %v246 = vadd.f32 0.0, %v245
    %v247 = vpop.f32.mrb[0].mxu0
    %v248 = vadd.f32 0.0, %v247
    %v249 = vpop.f32.mrb[0].mxu0
    %v250 = vadd.f32 0.0, %v249
    %v251 = vpop.f32.mrb[0].mxu0
    %v252 = vadd.f32 0.0, %v251
    %253 = vmatprep.mubr.bf16.mxu0 0
    %254 = vmatmul.mubr.bf16.gmra.mrb[0].mxu0 %v116
    %v255 = vpop.f32.mrb[0].mxu0
    %v256 = vadd.f32 0.0, %v255
    %v257 = vpop.f32.mrb[0].mxu0
    %v258 = vadd.f32 0.0, %v257
    %v259 = vpop.f32.mrb[0].mxu0
    %v260 = vadd.f32 0.0, %v259
    %v261 = vpop.f32.mrb[0].mxu0
    %v262 = vadd.f32 0.0, %v261
    %263 = vdwg.mxu0
    %264 = vmatprep.subr.bf16.mxu0 0
    %265 = vmatpush1.bf16.msra.mxu0 %v89
    %266 = vmatprep.subr.bf16.mxu0 0
    %267 = vmatpush1.bf16.msra.mxu0 %v94
    %268 = vmatprep.subr.bf16.mxu0 0
    %269 = vmatpush1.bf16.msra.mxu0 0
    %270 = vmatprep.subr.bf16.mxu0 0
    %271 = vmatpush1.bf16.msra.mxu0 0
    %272 = vmatprep.subr.bf16.mxu0 0
    %273 = vmatpush1.bf16.msra.mxu0 0
    %274 = vmatprep.subr.bf16.mxu0 0
    %275 = vmatpush1.bf16.msra.mxu0 0
    %276 = vmatprep.subr.bf16.mxu0 0
    %277 = vmatpush1.bf16.msra.mxu0 0
    %278 = vmatprep.subr.bf16.mxu0 0
    %279 = vmatpush1.bf16.msra.mxu0 0
    %280 = vmatprep.subr.bf16.mxu0 0
    %281 = vmatpush1.bf16.msra.mxu0 0
    %282 = vmatprep.subr.bf16.mxu0 0
    %283 = vmatpush1.bf16.msra.mxu0 0
    %284 = vmatprep.subr.bf16.mxu0 0
    %285 = vmatpush1.bf16.msra.mxu0 0
    %286 = vmatprep.subr.bf16.mxu0 0
    %287 = vmatpush1.bf16.msra.mxu0 0
    %288 = vmatprep.subr.bf16.mxu0 0
    %289 = vmatpush1.bf16.msra.mxu0 0
    %290 = vmatprep.subr.bf16.mxu0 0
    %291 = vmatpush1.bf16.msra.mxu0 0
    %292 = vmatprep.subr.bf16.mxu0 0
    %293 = vmatpush1.bf16.msra.mxu0 0
    %294 = vmatprep.subr.bf16.mxu0 0
    %295 = vmatpush1.bf16.msra.mxu0 0
    %296 = vmatprep.mubr.bf16.mxu0 0
    %297 = vmatmul.mubr.bf16.gmra.mrb[0].mxu0 %v107
    %v298 = vpop.f32.mrb[0].mxu0
    %v299 = vadd.f32 0.0, %v298
    %v300 = vpop.f32.mrb[0].mxu0
    %v301 = vpop.f32.mrb[0].mxu0
    %v302 = vadd.f32 0.0, %v301
    %v303 = vpop.f32.mrb[0].mxu0
    %304 = vmatprep.mubr.bf16.mxu0 0
    %305 = vmatmul.mubr.bf16.gmra.mrb[0].mxu0 %v110
    %v306 = vpop.f32.mrb[0].mxu0
    %v307 = vadd.f32 0.0, %v306
    %v308 = vpop.f32.mrb[0].mxu0
    %v309 = vpop.f32.mrb[0].mxu0
    %v310 = vadd.f32 0.0, %v309
    %v311 = vpop.f32.mrb[0].mxu0
    %312 = vmatprep.mubr.bf16.mxu0 0
    %313 = vmatmul.mubr.bf16.gmra.mrb[0].mxu0 %v113
    %v314 = vpop.f32.mrb[0].mxu0
    %v315 = vadd.f32 0.0, %v314
    %v316 = vpop.f32.mrb[0].mxu0
    %v317 = vpop.f32.mrb[0].mxu0
    %v318 = vadd.f32 0.0, %v317
    %v319 = vpop.f32.mrb[0].mxu0
    %320 = vmatprep.mubr.bf16.mxu0 0
    %321 = vmatmul.mubr.bf16.gmra.mrb[0].mxu0 %v116
    %v322 = vpop.f32.mrb[0].mxu0
    %v323 = vadd.f32 0.0, %v322
    %v324 = vpop.f32.mrb[0].mxu0
    %v325 = vpop.f32.mrb[0].mxu0
    %v326 = vadd.f32 0.0, %v325
    %v327 = vpop.f32.mrb[0].mxu0
    %328 = vdwg.mxu0
    %v329 = vld [vmem:[%s3] sm:$0x1]
    %331 = vset.pattern.permute.xlu0 0
    %332 = vperm.xlu0 %331, %v153
    %v333 = vpop.permute.xlu0 %332
    %336 = vset.pattern.permute.xlu0 0
    %337 = vperm.xlu0 %336, %v157
    %v338 = vpop.permute.xlu0 %337
    %341 = vset.pattern.permute.xlu0 0
    %342 = vperm.xlu0 %341, %v163
    %v343 = vpop.permute.xlu0 %342
    %346 = vset.pattern.permute.xlu0 0
    %347 = vperm.xlu0 %346, %v167
    %v348 = vpop.permute.xlu0 %347
    %351 = vset.pattern.permute.xlu0 0
    %352 = vperm.xlu0 %351, %v173
    %v353 = vpop.permute.xlu0 %352
    %356 = vset.pattern.permute.xlu0 0
    %357 = vperm.xlu0 %356, %v177
    %v358 = vpop.permute.xlu0 %357
    %361 = vset.pattern.permute.xlu0 0
    %362 = vperm.xlu0 %361, %v183
    %v363 = vpop.permute.xlu0 %362
    %366 = vset.pattern.permute.xlu0 0
    %367 = vperm.xlu0 %366, %v187
    %v368 = vpop.permute.xlu0 %367
    %v371 = vlaneseq
    %v372 = vshrl.u32 %v371, 7
    %v373 = vsub.s32 0, %v372
    %v374 = vrot.slane %v329, %v373
    %v376 = vmul.f32 %v333, %v374
    %v377 = vmul.f32 %v338, %v374
    %v378 = vmul.f32 %v343, %v374
    %v379 = vmul.f32 %v348, %v374
    %v380 = vmul.f32 %v353, %v374
    %v381 = vmul.f32 %v358, %v374
    %v382 = vmul.f32 %v363, %v374
    %v383 = vmul.f32 %v368, %v374
    %v384 = vmul.f32 %v376, 1.442695
    %v385 = vpow.pop %v384
    %v386 = vmul.f32 %v377, 1.442695
    %v387 = vpow.pop %v386
    %v388 = vmul.f32 %v378, 1.442695
    %v389 = vpow.pop %v388
    %v390 = vmul.f32 %v379, 1.442695
    %v391 = vpow.pop %v390
    %v392 = vmul.f32 %v380, 1.442695
    %v393 = vpow.pop %v392
    %v394 = vmul.f32 %v381, 1.442695
    %v395 = vpow.pop %v394
    %v396 = vmul.f32 %v382, 1.442695
    %v397 = vpow.pop %v396
    %v398 = vmul.f32 %v383, 1.442695
    %v399 = vpow.pop %v398
    %v400 = vstv %s28
    %v401 = vmul.f32 %v400, %v385
    %v402 = vmul.f32 %v400, %v387
    %v403 = vmul.f32 %v400, %v389
    %v404 = vmul.f32 %v400, %v391
    %v405 = vmul.f32 %v400, %v393
    %v406 = vmul.f32 %v400, %v395
    %v407 = vmul.f32 %v400, %v397
    %v408 = vmul.f32 %v400, %v399
    %v409 = vld [vmem:[%s4] sm:$0x1]
    %v410 = vld [vmem:[%s4 + $0x1] sm:$0x1]
    %v411 = vmul.f32 %v401, 0.5
    %v412 = vmul.f32 %v402, 0.5
    %v413 = vmul.f32 %v403, 0.5
    %v414 = vmul.f32 %v404, 0.5
    %v415 = vmul.f32 %v405, 0.5
    %v416 = vmul.f32 %v406, 0.5
    %v417 = vmul.f32 %v407, 0.5
    %v418 = vmul.f32 %v408, 0.5
    %v419 = vlaneseq
    %v420 = vshrl.u32 %v419, 7
    %v421 = vsub.s32 0, %v420
    %v422 = vrot.slane %v409, %v421
    %v423 = vmul.f32 %v411, %v422
    %v424 = vmul.f32 %v412, %v422
    %v425 = vmul.f32 %v413, %v422
    %v426 = vmul.f32 %v414, %v422
    %v427 = vmul.f32 %v415, %v422
    %v428 = vmul.f32 %v416, %v422
    %v429 = vmul.f32 %v417, %v422
    %v430 = vmul.f32 %v418, %v422
    %v431 = vsub.f32 1.0, %v423
    %v432 = vsub.f32 1.0, %v424
    %v433 = vsub.f32 1.0, %v425
    %v434 = vsub.f32 1.0, %v426
    %v435 = vsub.f32 1.0, %v427
    %v436 = vsub.f32 1.0, %v428
    %v437 = vsub.f32 1.0, %v429
    %v438 = vsub.f32 1.0, %v430
    %v439 = vsub.f32 0.0, %v411
    %v440 = vsub.f32 0.0, %v412
    %v441 = vsub.f32 0.0, %v413
    %v442 = vsub.f32 0.0, %v414
    %v443 = vsub.f32 0.0, %v415
    %v444 = vsub.f32 0.0, %v416
    %v445 = vsub.f32 0.0, %v417
    %v446 = vsub.f32 0.0, %v418
    %v447 = vlaneseq
    %v448 = vshrl.u32 %v447, 7
    %v449 = vsub.s32 0, %v448
    %v450 = vrot.slane %v410, %v449
    %v451 = vmul.f32 %v439, %v450
    %v452 = vmul.f32 %v440, %v450
    %v453 = vmul.f32 %v441, %v450
    %v454 = vmul.f32 %v442, %v450
    %v455 = vmul.f32 %v443, %v450
    %v456 = vmul.f32 %v444, %v450
    %v457 = vmul.f32 %v445, %v450
    %v458 = vmul.f32 %v446, %v450
    %v459 = vmul.f32 %v431, %v431
    %v460 = vmul.f32 %v432, %v432
    %v461 = vmul.f32 %v433, %v433
    %v462 = vmul.f32 %v434, %v434
    %v463 = vmul.f32 %v435, %v435
    %v464 = vmul.f32 %v436, %v436
    %v465 = vmul.f32 %v437, %v437
    %v466 = vmul.f32 %v438, %v438
    %v467 = vmul.f32 %v451, %v451
    %v468 = vmul.f32 %v452, %v452
    %v469 = vmul.f32 %v453, %v453
    %v470 = vmul.f32 %v454, %v454
    %v471 = vmul.f32 %v455, %v455
    %v472 = vmul.f32 %v456, %v456
    %v473 = vmul.f32 %v457, %v457
    %v474 = vmul.f32 %v458, %v458
    %v475 = vadd.f32 %v459, %v467
    %v476 = vadd.f32 %v460, %v468
    %v477 = vadd.f32 %v461, %v469
    %v478 = vadd.f32 %v462, %v470
    %v479 = vadd.f32 %v463, %v471
    %v480 = vadd.f32 %v464, %v472
    %v481 = vadd.f32 %v465, %v473
    %v482 = vadd.f32 %v466, %v474
    %v483 = vrcp.pop %v475
    %v484 = vmul.f32 1.0, %v483
    %v485 = vrcp.pop %v476
    %v486 = vmul.f32 1.0, %v485
    %v487 = vrcp.pop %v477
    %v488 = vmul.f32 1.0, %v487
    %v489 = vrcp.pop %v478
    %v490 = vmul.f32 1.0, %v489
    %v491 = vrcp.pop %v479
    %v492 = vmul.f32 1.0, %v491
    %v493 = vrcp.pop %v480
    %v494 = vmul.f32 1.0, %v493
    %v495 = vrcp.pop %v481
    %v496 = vmul.f32 1.0, %v495
    %v497 = vrcp.pop %v482
    %v498 = vmul.f32 1.0, %v497
    %v499 = vmul.f32 %v431, %v484
    %v500 = vmul.f32 %v432, %v486
    %v501 = vmul.f32 %v433, %v488
    %v502 = vmul.f32 %v434, %v490
    %v503 = vmul.f32 %v435, %v492
    %v504 = vmul.f32 %v436, %v494
    %v505 = vmul.f32 %v437, %v496
    %v506 = vmul.f32 %v438, %v498
    %v507 = vsub.f32 0.0, %v451
    %v508 = vsub.f32 0.0, %v452
    %v509 = vsub.f32 0.0, %v453
    %v510 = vsub.f32 0.0, %v454
    %v511 = vsub.f32 0.0, %v455
    %v512 = vsub.f32 0.0, %v456
    %v513 = vsub.f32 0.0, %v457
    %v514 = vsub.f32 0.0, %v458
    %v515 = vmul.f32 %v507, %v484
    %v516 = vmul.f32 %v508, %v486
    %v517 = vmul.f32 %v509, %v488
    %v518 = vmul.f32 %v510, %v490
    %v519 = vmul.f32 %v511, %v492
    %v520 = vmul.f32 %v512, %v494
    %v521 = vmul.f32 %v513, %v496
    %v522 = vmul.f32 %v514, %v498
    %v523 = vadd.f32 %v423, 1.0
    %v524 = vadd.f32 %v424, 1.0
    %v525 = vadd.f32 %v425, 1.0
    %v526 = vadd.f32 %v426, 1.0
    %v527 = vadd.f32 %v427, 1.0
    %v528 = vadd.f32 %v428, 1.0
    %v529 = vadd.f32 %v429, 1.0
    %v530 = vadd.f32 %v430, 1.0
    %v531 = vmul.f32 %v411, %v450
    %v532 = vmul.f32 %v412, %v450
    %v533 = vmul.f32 %v413, %v450
    %v534 = vmul.f32 %v414, %v450
    %v535 = vmul.f32 %v415, %v450
    %v536 = vmul.f32 %v416, %v450
    %v537 = vmul.f32 %v417, %v450
    %v538 = vmul.f32 %v418, %v450
    %v539 = vmul.f32 %v499, %v523
    %v540 = vmul.f32 %v500, %v524
    %v541 = vmul.f32 %v501, %v525
    %v542 = vmul.f32 %v502, %v526
    %v543 = vmul.f32 %v503, %v527
    %v544 = vmul.f32 %v504, %v528
    %v545 = vmul.f32 %v505, %v529
    %v546 = vmul.f32 %v506, %v530
    %v547 = vmul.f32 %v515, %v531
    %v548 = vmul.f32 %v516, %v532
    %v549 = vmul.f32 %v517, %v533
    %v550 = vmul.f32 %v518, %v534
    %v551 = vmul.f32 %v519, %v535
    %v552 = vmul.f32 %v520, %v536
    %v553 = vmul.f32 %v521, %v537
    %v554 = vmul.f32 %v522, %v538
    %v555 = vsub.f32 %v539, %v547
    %v556 = vsub.f32 %v540, %v548
    %v557 = vsub.f32 %v541, %v549
    %v558 = vsub.f32 %v542, %v550
    %v559 = vsub.f32 %v543, %v551
    %v560 = vsub.f32 %v544, %v552
    %v561 = vsub.f32 %v545, %v553
    %v562 = vsub.f32 %v546, %v554
    %563 = vst.msk [vmem:[#allocation2] sm:$0xff] %vm105, %v555
    %564 = vst.msk [vmem:[#allocation2 + $0x8] sm:$0xff] %vm105, %v556
    %565 = vst.msk [vmem:[#allocation2 + $0x10] sm:$0xff] %vm105, %v557
    %566 = vst.msk [vmem:[#allocation2 + $0x18] sm:$0xff] %vm105, %v558
    %567 = vst.msk [vmem:[#allocation2 + $0x20] sm:$0xff] %vm105, %v559
    %568 = vst.msk [vmem:[#allocation2 + $0x28] sm:$0xff] %vm105, %v560
    %569 = vst.msk [vmem:[#allocation2 + $0x30] sm:$0xff] %vm105, %v561
    %570 = vst.msk [vmem:[#allocation2 + $0x38] sm:$0xff] %vm105, %v562
    %v571 = vmul.f32 %v499, %v531
    %v572 = vmul.f32 %v500, %v532
    %v573 = vmul.f32 %v501, %v533
    %v574 = vmul.f32 %v502, %v534
    %v575 = vmul.f32 %v503, %v535
    %v576 = vmul.f32 %v504, %v536
    %v577 = vmul.f32 %v505, %v537
    %v578 = vmul.f32 %v506, %v538
    %v579 = vmul.f32 %v515, %v523
    %v580 = vmul.f32 %v516, %v524
    %v581 = vmul.f32 %v517, %v525
    %v582 = vmul.f32 %v518, %v526
    %v583 = vmul.f32 %v519, %v527
    %v584 = vmul.f32 %v520, %v528
    %v585 = vmul.f32 %v521, %v529
    %v586 = vmul.f32 %v522, %v530
    %v587 = vadd.f32 %v571, %v579
    %v588 = vadd.f32 %v572, %v580
    %v589 = vadd.f32 %v573, %v581
    %v590 = vadd.f32 %v574, %v582
    %v591 = vadd.f32 %v575, %v583
    %v592 = vadd.f32 %v576, %v584
    %v593 = vadd.f32 %v577, %v585
    %v594 = vadd.f32 %v578, %v586
    %595 = vst.msk [vmem:[#allocation3] sm:$0xff] %vm105, %v587
    %596 = vst.msk [vmem:[#allocation3 + $0x8] sm:$0xff] %vm105, %v588
    %597 = vst.msk [vmem:[#allocation3 + $0x10] sm:$0xff] %vm105, %v589
    %598 = vst.msk [vmem:[#allocation3 + $0x18] sm:$0xff] %vm105, %v590
    %599 = vst.msk [vmem:[#allocation3 + $0x20] sm:$0xff] %vm105, %v591
    %600 = vst.msk [vmem:[#allocation3 + $0x28] sm:$0xff] %vm105, %v592
    %601 = vst.msk [vmem:[#allocation3 + $0x30] sm:$0xff] %vm105, %v593
    %602 = vst.msk [vmem:[#allocation3 + $0x38] sm:$0xff] %vm105, %v594
    %v603 = vmul.f32 %v155, %v29
    %v604 = vmul.f32 %v159, %v30
    %v605 = vmul.f32 %v165, %v31
    %v606 = vmul.f32 %v169, %v32
    %v607 = vmul.f32 %v175, %v33
    %v608 = vmul.f32 %v179, %v34
    %v609 = vmul.f32 %v185, %v35
    %v610 = vmul.f32 %v189, %v36
    %v611 = vsel %vm105, %v603, 0.0
    %612 = vadd.xlane.f32.xlu0 %v611
    %v613 = vpop.xlane.xlu0 %612
    %v614 = vsel %vm105, %v604, 0.0
    %615 = vadd.xlane.f32.xlu0 %v614
    %v616 = vpop.xlane.xlu0 %615
    %v617 = vsel %vm105, %v605, 0.0
    %618 = vadd.xlane.f32.xlu0 %v617
    %v619 = vpop.xlane.xlu0 %618
    %v620 = vsel %vm105, %v606, 0.0
    %621 = vadd.xlane.f32.xlu0 %v620
    %v622 = vpop.xlane.xlu0 %621
    %v623 = vsel %vm105, %v607, 0.0
    %624 = vadd.xlane.f32.xlu0 %v623
    %v625 = vpop.xlane.xlu0 %624
    %v626 = vsel %vm105, %v608, 0.0
    %627 = vadd.xlane.f32.xlu0 %v626
    %v628 = vpop.xlane.xlu0 %627
    %v629 = vsel %vm105, %v609, 0.0
    %630 = vadd.xlane.f32.xlu0 %v629
    %v631 = vpop.xlane.xlu0 %630
    %v632 = vsel %vm105, %v610, 0.0
    %633 = vadd.xlane.f32.xlu0 %v632
    %v634 = vpop.xlane.xlu0 %633
    %v635 = vmul.f32 %v155, %v613
    %v636 = vmul.f32 %v159, %v616
    %v637 = vmul.f32 %v165, %v619
    %v638 = vmul.f32 %v169, %v622
    %v639 = vmul.f32 %v175, %v625
    %v640 = vmul.f32 %v179, %v628
    %v641 = vmul.f32 %v185, %v631
    %v642 = vmul.f32 %v189, %v634
    %v643 = vmul.f32 %v226, %v29
    %v644 = vmul.f32 %v230, %v30
    %v645 = vmul.f32 %v236, %v31
    %v646 = vmul.f32 %v240, %v32
    %v647 = vmul.f32 %v246, %v33
    %v648 = vmul.f32 %v250, %v34
    %v649 = vmul.f32 %v256, %v35
    %v650 = vmul.f32 %v260, %v36
    %v651 = vsel %vm105, %v643, 0.0
    %652 = vadd.xlane.f32.xlu0 %v651
    %v653 = vpop.xlane.xlu0 %652
    %v654 = vsel %vm105, %v644, 0.0
    %655 = vadd.xlane.f32.xlu0 %v654
    %v656 = vpop.xlane.xlu0 %655
    %v657 = vsel %vm105, %v645, 0.0
    %658 = vadd.xlane.f32.xlu0 %v657
    %v659 = vpop.xlane.xlu0 %658
    %v660 = vsel %vm105, %v646, 0.0
    %661 = vadd.xlane.f32.xlu0 %v660
    %v662 = vpop.xlane.xlu0 %661
    %v663 = vsel %vm105, %v647, 0.0
    %664 = vadd.xlane.f32.xlu0 %v663
    %v665 = vpop.xlane.xlu0 %664
    %v666 = vsel %vm105, %v648, 0.0
    %667 = vadd.xlane.f32.xlu0 %v666
    %v668 = vpop.xlane.xlu0 %667
    %v669 = vsel %vm105, %v649, 0.0
    %670 = vadd.xlane.f32.xlu0 %v669
    %v671 = vpop.xlane.xlu0 %670
    %v672 = vsel %vm105, %v650, 0.0
    %673 = vadd.xlane.f32.xlu0 %v672
    %v674 = vpop.xlane.xlu0 %673
    %v675 = vmul.f32 %v226, %v653
    %v676 = vmul.f32 %v230, %v656
    %v677 = vmul.f32 %v236, %v659
    %v678 = vmul.f32 %v240, %v662
    %v679 = vmul.f32 %v246, %v665
    %v680 = vmul.f32 %v250, %v668
    %v681 = vmul.f32 %v256, %v671
    %v682 = vmul.f32 %v260, %v674
    %v683 = vmul.f32 %v499, %v401
    %v684 = vmul.f32 %v500, %v402
    %v685 = vmul.f32 %v501, %v403
    %v686 = vmul.f32 %v502, %v404
    %v687 = vmul.f32 %v503, %v405
    %v688 = vmul.f32 %v504, %v406
    %v689 = vmul.f32 %v505, %v407
    %v690 = vmul.f32 %v506, %v408
    %v691 = vmul.f32 %v515, %v401
    %v692 = vmul.f32 %v516, %v402
    %v693 = vmul.f32 %v517, %v403
    %v694 = vmul.f32 %v518, %v404
    %v695 = vmul.f32 %v519, %v405
    %v696 = vmul.f32 %v520, %v406
    %v697 = vmul.f32 %v521, %v407
    %v698 = vmul.f32 %v522, %v408
    %v699 = vmul.f32 %v683, %v635
    %v700 = vmul.f32 %v684, %v636
    %v701 = vmul.f32 %v685, %v637
    %v702 = vmul.f32 %v686, %v638
    %v703 = vmul.f32 %v687, %v639
    %v704 = vmul.f32 %v688, %v640
    %v705 = vmul.f32 %v689, %v641
    %v706 = vmul.f32 %v690, %v642
    %v707 = vmul.f32 %v691, %v675
    %v708 = vmul.f32 %v692, %v676
    %v709 = vmul.f32 %v693, %v677
    %v710 = vmul.f32 %v694, %v678
    %v711 = vmul.f32 %v695, %v679
    %v712 = vmul.f32 %v696, %v680
    %v713 = vmul.f32 %v697, %v681
    %v714 = vmul.f32 %v698, %v682
    %v715 = vsub.f32 %v699, %v707
    %v716 = vsub.f32 %v700, %v708
    %v717 = vsub.f32 %v701, %v709
    %v718 = vsub.f32 %v702, %v710
    %v719 = vsub.f32 %v703, %v711
    %v720 = vsub.f32 %v704, %v712
    %v721 = vsub.f32 %v705, %v713
    %v722 = vsub.f32 %v706, %v714
    %723 = vst.msk [vmem:[#allocation4] sm:$0xff] %vm105, %v715
    %724 = vst.msk [vmem:[#allocation4 + $0x8] sm:$0xff] %vm105, %v716
    %725 = vst.msk [vmem:[#allocation4 + $0x10] sm:$0xff] %vm105, %v717
    %726 = vst.msk [vmem:[#allocation4 + $0x18] sm:$0xff] %vm105, %v718
    %727 = vst.msk [vmem:[#allocation4 + $0x20] sm:$0xff] %vm105, %v719
    %728 = vst.msk [vmem:[#allocation4 + $0x28] sm:$0xff] %vm105, %v720
    %729 = vst.msk [vmem:[#allocation4 + $0x30] sm:$0xff] %vm105, %v721
    %730 = vst.msk [vmem:[#allocation4 + $0x38] sm:$0xff] %vm105, %v722
    %v731 = vmul.f32 %v691, %v635
    %v732 = vmul.f32 %v692, %v636
    %v733 = vmul.f32 %v693, %v637
    %v734 = vmul.f32 %v694, %v638
    %v735 = vmul.f32 %v695, %v639
    %v736 = vmul.f32 %v696, %v640
    %v737 = vmul.f32 %v697, %v641
    %v738 = vmul.f32 %v698, %v642
    %v739 = vmul.f32 %v683, %v675
    %v740 = vmul.f32 %v684, %v676
    %v741 = vmul.f32 %v685, %v677
    %v742 = vmul.f32 %v686, %v678
    %v743 = vmul.f32 %v687, %v679
    %v744 = vmul.f32 %v688, %v680
    %v745 = vmul.f32 %v689, %v681
    %v746 = vmul.f32 %v690, %v682
    %v747 = vadd.f32 %v731, %v739
    %v748 = vadd.f32 %v732, %v740
    %v749 = vadd.f32 %v733, %v741
    %v750 = vadd.f32 %v734, %v742
    %v751 = vadd.f32 %v735, %v743
    %v752 = vadd.f32 %v736, %v744
    %v753 = vadd.f32 %v737, %v745
    %v754 = vadd.f32 %v738, %v746
    %755 = vst.msk [vmem:[#allocation5] sm:$0xff] %vm105, %v747
    %756 = vst.msk [vmem:[#allocation5 + $0x8] sm:$0xff] %vm105, %v748
    %757 = vst.msk [vmem:[#allocation5 + $0x10] sm:$0xff] %vm105, %v749
    %758 = vst.msk [vmem:[#allocation5 + $0x18] sm:$0xff] %vm105, %v750
    %759 = vst.msk [vmem:[#allocation5 + $0x20] sm:$0xff] %vm105, %v751
    %760 = vst.msk [vmem:[#allocation5 + $0x28] sm:$0xff] %vm105, %v752
    %761 = vst.msk [vmem:[#allocation5 + $0x30] sm:$0xff] %vm105, %v753
    %762 = vst.msk [vmem:[#allocation5 + $0x38] sm:$0xff] %vm105, %v754
    %v763 = vld [vmem:[%s5] sm:$0x1]
    %v765 = vlaneseq
    %v766 = vshrl.u32 %v765, 7
    %v767 = vsub.s32 0, %v766
    %v768 = vrot.slane %v763, %v767
    %v770 = vmul.f32 %v768, %v29
    %v771 = vmul.f32 %v768, %v30
    %v772 = vmul.f32 %v768, %v31
    %v773 = vmul.f32 %v768, %v32
    %v774 = vmul.f32 %v768, %v33
    %v775 = vmul.f32 %v768, %v34
    %v776 = vmul.f32 %v768, %v35
    %v777 = vmul.f32 %v768, %v36
    %778 = vst.msk [vmem:[%s6] sm:$0xff] %vm105, %v770
    %779 = vst.msk [vmem:[%s6 + $0x8] sm:$0xff] %vm105, %v771
    %780 = vst.msk [vmem:[%s6 + $0x10] sm:$0xff] %vm105, %v772
    %781 = vst.msk [vmem:[%s6 + $0x18] sm:$0xff] %vm105, %v773
    %782 = vst.msk [vmem:[%s6 + $0x20] sm:$0xff] %vm105, %v774
    %783 = vst.msk [vmem:[%s6 + $0x28] sm:$0xff] %vm105, %v775
    %784 = vst.msk [vmem:[%s6 + $0x30] sm:$0xff] %vm105, %v776
    %785 = vst.msk [vmem:[%s6 + $0x38] sm:$0xff] %vm105, %v777
    %p786 = scmp.eq.s32.totalorder 0, 0
    // Predicated region
    $region22: #{tpu_custom_call.1} parent=1 // pred_check
      %p787 = pneg %p786
    $region23: #{tpu_custom_call.1} parent=1 // pred_check_branch
      %789 = sbr.rel (%p787) target = $region25
    $region24: #{tpu_custom_call.1} parent=1 // pred_region
      %790 = vst.msk [vmem:[#allocation8] sm:$0xff] %vm105, 0.0
      %791 = vst.msk [vmem:[#allocation10] sm:$0xff] %vm105, 0.0
    $region25: #{tpu_custom_call.1} parent=1 // pred_fallthru
      _
    %v792 = vld [vmem:[#allocation8] sm:$0xff]
    %v793 = vld [vmem:[#allocation10] sm:$0xff]
    %v794 = vld [vmem:[#allocation2] sm:$0xff]
    %v795 = vld [vmem:[#allocation3] sm:$0xff]
    %v796 = vld [vmem:[#allocation4] sm:$0xff]
    %v797 = vld [vmem:[#allocation5] sm:$0xff]
    %v798 = vmul.f32 %v794, %v792
    %v799 = vmul.f32 %v795, %v793
    %v800 = vsub.f32 %v798, %v799
    %v801 = vadd.f32 %v800, %v796
    %v802 = vmul.f32 %v795, %v792
    %v803 = vmul.f32 %v794, %v793
    %v804 = vadd.f32 %v802, %v803
    %v805 = vadd.f32 %v804, %v797
    %806 = vst.msk [vmem:[#allocation4] sm:$0xff] %vm105, %v801
    %807 = vst.msk [vmem:[#allocation5] sm:$0xff] %vm105, %v805
    %s808 = sadd.s32 0, 8
    %s809 = scalar_lea.vmem [#allocation2], %s808
    %v810 = vld [vmem:[%s809] sm:$0xff]
    %s811 = scalar_lea.vmem [#allocation3], %s808
    %v812 = vld [vmem:[%s811] sm:$0xff]
    %s813 = scalar_lea.vmem [#allocation4], %s808
    %v814 = vld [vmem:[%s813] sm:$0xff]
    %s815 = scalar_lea.vmem [#allocation5], %s808
    %v816 = vld [vmem:[%s815] sm:$0xff]
    %v817 = vmul.f32 %v810, %v801
    %v818 = vmul.f32 %v812, %v805
    %v819 = vsub.f32 %v817, %v818
    %v820 = vadd.f32 %v819, %v814
    %v821 = vmul.f32 %v812, %v801
    %v822 = vmul.f32 %v810, %v805
    %v823 = vadd.f32 %v821, %v822
    %v824 = vadd.f32 %v823, %v816
    %825 = vst.msk [vmem:[%s813] sm:$0xff] %vm105, %v820
    %826 = vst.msk [vmem:[%s815] sm:$0xff] %vm105, %v824
    %s827 = sadd.s32 0, 16
    %s828 = scalar_lea.vmem [#allocation2], %s827
    %v829 = vld [vmem:[%s828] sm:$0xff]
    %s830 = scalar_lea.vmem [#allocation3], %s827
    %v831 = vld [vmem:[%s830] sm:$0xff]
    %s832 = scalar_lea.vmem [#allocation4], %s827
    %v833 = vld [vmem:[%s832] sm:$0xff]
    %s834 = scalar_lea.vmem [#allocation5], %s827
    %v835 = vld [vmem:[%s834] sm:$0xff]
    %v836 = vmul.f32 %v829, %v820
    %v837 = vmul.f32 %v831, %v824
    %v838 = vsub.f32 %v836, %v837
    %v839 = vadd.f32 %v838, %v833
    %v840 = vmul.f32 %v831, %v820
    %v841 = vmul.f32 %v829, %v824
    %v842 = vadd.f32 %v840, %v841
    %v843 = vadd.f32 %v842, %v835
    %844 = vst.msk [vmem:[%s832] sm:$0xff] %vm105, %v839
    %845 = vst.msk [vmem:[%s834] sm:$0xff] %vm105, %v843
    %s846 = sadd.s32 0, 24
    %s847 = scalar_lea.vmem [#allocation2], %s846
    %v848 = vld [vmem:[%s847] sm:$0xff]
    %s849 = scalar_lea.vmem [#allocation3], %s846
    %v850 = vld [vmem:[%s849] sm:$0xff]
    %s851 = scalar_lea.vmem [#allocation4], %s846
    %v852 = vld [vmem:[%s851] sm:$0xff]
    %s853 = scalar_lea.vmem [#allocation5], %s846
    %v854 = vld [vmem:[%s853] sm:$0xff]
    %v855 = vmul.f32 %v848, %v839
    %v856 = vmul.f32 %v850, %v843
    %v857 = vsub.f32 %v855, %v856
    %v858 = vadd.f32 %v857, %v852
    %v859 = vmul.f32 %v850, %v839
    %v860 = vmul.f32 %v848, %v843
    %v861 = vadd.f32 %v859, %v860
    %v862 = vadd.f32 %v861, %v854
    %863 = vst.msk [vmem:[%s851] sm:$0xff] %vm105, %v858
    %864 = vst.msk [vmem:[%s853] sm:$0xff] %vm105, %v862
    %s865 = sadd.s32 0, 32
    %s866 = scalar_lea.vmem [#allocation2], %s865
    %v867 = vld [vmem:[%s866] sm:$0xff]
    %s868 = scalar_lea.vmem [#allocation3], %s865
    %v869 = vld [vmem:[%s868] sm:$0xff]
    %s870 = scalar_lea.vmem [#allocation4], %s865
    %v871 = vld [vmem:[%s870] sm:$0xff]
    %s872 = scalar_lea.vmem [#allocation5], %s865
    %v873 = vld [vmem:[%s872] sm:$0xff]
    %v874 = vmul.f32 %v867, %v858
    %v875 = vmul.f32 %v869, %v862
    %v876 = vsub.f32 %v874, %v875
    %v877 = vadd.f32 %v876, %v871
    %v878 = vmul.f32 %v869, %v858
    %v879 = vmul.f32 %v867, %v862
    %v880 = vadd.f32 %v878, %v879
    %v881 = vadd.f32 %v880, %v873
    %882 = vst.msk [vmem:[%s870] sm:$0xff] %vm105, %v877
    %883 = vst.msk [vmem:[%s872] sm:$0xff] %vm105, %v881
    %s884 = sadd.s32 0, 40
    %s885 = scalar_lea.vmem [#allocation2], %s884
    %v886 = vld [vmem:[%s885] sm:$0xff]
    %s887 = scalar_lea.vmem [#allocation3], %s884
    %v888 = vld [vmem:[%s887] sm:$0xff]
    %s889 = scalar_lea.vmem [#allocation4], %s884
    %v890 = vld [vmem:[%s889] sm:$0xff]
    %s891 = scalar_lea.vmem [#allocation5], %s884
    %v892 = vld [vmem:[%s891] sm:$0xff]
    %v893 = vmul.f32 %v886, %v877
    %v894 = vmul.f32 %v888, %v881
    %v895 = vsub.f32 %v893, %v894
    %v896 = vadd.f32 %v895, %v890
    %v897 = vmul.f32 %v888, %v877
    %v898 = vmul.f32 %v886, %v881
    %v899 = vadd.f32 %v897, %v898
    %v900 = vadd.f32 %v899, %v892
    %901 = vst.msk [vmem:[%s889] sm:$0xff] %vm105, %v896
    %902 = vst.msk [vmem:[%s891] sm:$0xff] %vm105, %v900
    %s903 = sadd.s32 0, 48
    %s904 = scalar_lea.vmem [#allocation2], %s903
    %v905 = vld [vmem:[%s904] sm:$0xff]
    %s906 = scalar_lea.vmem [#allocation3], %s903
    %v907 = vld [vmem:[%s906] sm:$0xff]
    %s908 = scalar_lea.vmem [#allocation4], %s903
    %v909 = vld [vmem:[%s908] sm:$0xff]
    %s910 = scalar_lea.vmem [#allocation5], %s903
    %v911 = vld [vmem:[%s910] sm:$0xff]
    %v912 = vmul.f32 %v905, %v896
    %v913 = vmul.f32 %v907, %v900
    %v914 = vsub.f32 %v912, %v913
    %v915 = vadd.f32 %v914, %v909
    %v916 = vmul.f32 %v907, %v896
    %v917 = vmul.f32 %v905, %v900
    %v918 = vadd.f32 %v916, %v917
    %v919 = vadd.f32 %v918, %v911
    %920 = vst.msk [vmem:[%s908] sm:$0xff] %vm105, %v915
    %921 = vst.msk [vmem:[%s910] sm:$0xff] %vm105, %v919
    %s922 = sadd.s32 0, 56
    %s923 = scalar_lea.vmem [#allocation2], %s922
    %v924 = vld [vmem:[%s923] sm:$0xff]
    %s925 = scalar_lea.vmem [#allocation3], %s922
    %v926 = vld [vmem:[%s925] sm:$0xff]
    %s927 = scalar_lea.vmem [#allocation4], %s922
    %v928 = vld [vmem:[%s927] sm:$0xff]
    %s929 = scalar_lea.vmem [#allocation5], %s922
    %v930 = vld [vmem:[%s929] sm:$0xff]
    %v931 = vmul.f32 %v924, %v915
    %v932 = vmul.f32 %v926, %v919
    %v933 = vsub.f32 %v931, %v932
    %v934 = vadd.f32 %v933, %v928
    %v935 = vmul.f32 %v926, %v915
    %v936 = vmul.f32 %v924, %v919
    %v937 = vadd.f32 %v935, %v936
    %v938 = vadd.f32 %v937, %v930
    %939 = vst.msk [vmem:[%s927] sm:$0xff] %vm105, %v934
    %940 = vst.msk [vmem:[%s929] sm:$0xff] %vm105, %v938
    %941 = vst.msk [vmem:[#allocation8] sm:$0xff] %vm105, %v934
    %942 = vst.msk [vmem:[#allocation10] sm:$0xff] %vm105, %v938
    %v943 = vld [vmem:[#allocation4] sm:$0xff]
    %v944 = vld [vmem:[#allocation4 + $0x8] sm:$0xff]
    %v945 = vld [vmem:[#allocation4 + $0x10] sm:$0xff]
    %v946 = vld [vmem:[#allocation4 + $0x18] sm:$0xff]
    %v947 = vld [vmem:[#allocation4 + $0x20] sm:$0xff]
    %v948 = vld [vmem:[#allocation4 + $0x28] sm:$0xff]
    %v949 = vld [vmem:[#allocation4 + $0x30] sm:$0xff]
    %v950 = vld [vmem:[#allocation4 + $0x38] sm:$0xff]
    %v951 = vld [vmem:[#allocation5] sm:$0xff]
    %v952 = vld [vmem:[#allocation5 + $0x8] sm:$0xff]
    %v953 = vld [vmem:[#allocation5 + $0x10] sm:$0xff]
    %v954 = vld [vmem:[#allocation5 + $0x18] sm:$0xff]
    %v955 = vld [vmem:[#allocation5 + $0x20] sm:$0xff]
    %v956 = vld [vmem:[#allocation5 + $0x28] sm:$0xff]
    %v957 = vld [vmem:[#allocation5 + $0x30] sm:$0xff]
    %v958 = vld [vmem:[#allocation5 + $0x38] sm:$0xff]
    %v959 = vld [vmem:[%s6] sm:$0xff]
    %v960 = vld [vmem:[%s6 + $0x8] sm:$0xff]
    %v961 = vld [vmem:[%s6 + $0x10] sm:$0xff]
    %v962 = vld [vmem:[%s6 + $0x18] sm:$0xff]
    %v963 = vld [vmem:[%s6 + $0x20] sm:$0xff]
    %v964 = vld [vmem:[%s6 + $0x28] sm:$0xff]
    %v965 = vld [vmem:[%s6 + $0x30] sm:$0xff]
    %v966 = vld [vmem:[%s6 + $0x38] sm:$0xff]
    %v967 = vmul.f32 %v228, %v943
    %v968 = vmul.f32 %v232, %v944
    %v969 = vmul.f32 %v238, %v945
    %v970 = vmul.f32 %v242, %v946
    %v971 = vmul.f32 %v248, %v947
    %v972 = vmul.f32 %v252, %v948
    %v973 = vmul.f32 %v258, %v949
    %v974 = vmul.f32 %v262, %v950
    %v975 = vsel %vm105, %v967, 0.0
    %976 = vadd.xlane.f32.xlu0 %v975
    %v977 = vpop.xlane.xlu0 %976
    %v978 = vsel %vm105, %v968, 0.0
    %979 = vadd.xlane.f32.xlu0 %v978
    %v980 = vpop.xlane.xlu0 %979
    %v981 = vsel %vm105, %v969, 0.0
    %982 = vadd.xlane.f32.xlu0 %v981
    %v983 = vpop.xlane.xlu0 %982
    %v984 = vsel %vm105, %v970, 0.0
    %985 = vadd.xlane.f32.xlu0 %v984
    %v986 = vpop.xlane.xlu0 %985
    %v987 = vsel %vm105, %v971, 0.0
    %988 = vadd.xlane.f32.xlu0 %v987
    %v989 = vpop.xlane.xlu0 %988
    %v990 = vsel %vm105, %v972, 0.0
    %991 = vadd.xlane.f32.xlu0 %v990
    %v992 = vpop.xlane.xlu0 %991
    %v993 = vsel %vm105, %v973, 0.0
    %994 = vadd.xlane.f32.xlu0 %v993
    %v995 = vpop.xlane.xlu0 %994
    %v996 = vsel %vm105, %v974, 0.0
    %997 = vadd.xlane.f32.xlu0 %v996
    %v998 = vpop.xlane.xlu0 %997
    %v999 = vmul.f32 %v228, %v977
    %v1000 = vmul.f32 %v232, %v980
    %v1001 = vmul.f32 %v238, %v983
    %v1002 = vmul.f32 %v242, %v986
    %v1003 = vmul.f32 %v248, %v989
    %v1004 = vmul.f32 %v252, %v992
    %v1005 = vmul.f32 %v258, %v995
    %v1006 = vmul.f32 %v262, %v998
    %v1007 = vadd.f32 %v959, %v999
    %v1008 = vadd.f32 %v960, %v1000
    %v1009 = vadd.f32 %v961, %v1001
    %v1010 = vadd.f32 %v962, %v1002
    %v1011 = vadd.f32 %v963, %v1003
    %v1012 = vadd.f32 %v964, %v1004
    %v1013 = vadd.f32 %v965, %v1005
    %v1014 = vadd.f32 %v966, %v1006
    %v1015 = vmul.f32 %v299, %v951
    %v1016 = vmul.f32 %v302, %v952
    %v1017 = vmul.f32 %v307, %v953
    %v1018 = vmul.f32 %v310, %v954
    %v1019 = vmul.f32 %v315, %v955
    %v1020 = vmul.f32 %v318, %v956
    %v1021 = vmul.f32 %v323, %v957
    %v1022 = vmul.f32 %v326, %v958
    %v1023 = vsel %vm105, %v1015, 0.0
    %1024 = vadd.xlane.f32.xlu0 %v1023
    %v1025 = vpop.xlane.xlu0 %1024
    %v1026 = vsel %vm105, %v1016, 0.0
    %1027 = vadd.xlane.f32.xlu0 %v1026
    %v1028 = vpop.xlane.xlu0 %1027
    %v1029 = vsel %vm105, %v1017, 0.0
    %1030 = vadd.xlane.f32.xlu0 %v1029
    %v1031 = vpop.xlane.xlu0 %1030
    %v1032 = vsel %vm105, %v1018, 0.0
    %1033 = vadd.xlane.f32.xlu0 %v1032
    %v1034 = vpop.xlane.xlu0 %1033
    %v1035 = vsel %vm105, %v1019, 0.0
    %1036 = vadd.xlane.f32.xlu0 %v1035
    %v1037 = vpop.xlane.xlu0 %1036
    %v1038 = vsel %vm105, %v1020, 0.0
    %1039 = vadd.xlane.f32.xlu0 %v1038
    %v1040 = vpop.xlane.xlu0 %1039
    %v1041 = vsel %vm105, %v1021, 0.0
    %1042 = vadd.xlane.f32.xlu0 %v1041
    %v1043 = vpop.xlane.xlu0 %1042
    %v1044 = vsel %vm105, %v1022, 0.0
    %1045 = vadd.xlane.f32.xlu0 %v1044
    %v1046 = vpop.xlane.xlu0 %1045
    %v1047 = vmul.f32 %v299, %v1025
    %v1048 = vmul.f32 %v302, %v1028
    %v1049 = vmul.f32 %v307, %v1031
    %v1050 = vmul.f32 %v310, %v1034
    %v1051 = vmul.f32 %v315, %v1037
    %v1052 = vmul.f32 %v318, %v1040
    %v1053 = vmul.f32 %v323, %v1043
    %v1054 = vmul.f32 %v326, %v1046
    %v1055 = vsub.f32 %v1007, %v1047
    %v1056 = vsub.f32 %v1008, %v1048
    %v1057 = vsub.f32 %v1009, %v1049
    %v1058 = vsub.f32 %v1010, %v1050
    %v1059 = vsub.f32 %v1011, %v1051
    %v1060 = vsub.f32 %v1012, %v1052
    %v1061 = vsub.f32 %v1013, %v1053
    %v1062 = vsub.f32 %v1014, %v1054
    %1063 = vst.msk [vmem:[%s6] sm:$0xff] %vm105, %v1055
    %1064 = vst.msk [vmem:[%s6 + $0x8] sm:$0xff] %vm105, %v1056
    %1065 = vst.msk [vmem:[%s6 + $0x10] sm:$0xff] %vm105, %v1057
    %1066 = vst.msk [vmem:[%s6 + $0x18] sm:$0xff] %vm105, %v1058
    %1067 = vst.msk [vmem:[%s6 + $0x20] sm:$0xff] %vm105, %v1059
    %1068 = vst.msk [vmem:[%s6 + $0x28] sm:$0xff] %vm105, %v1060
    %1069 = vst.msk [vmem:[%s6 + $0x30] sm:$0xff] %vm105, %v1061
    %1070 = vst.msk [vmem:[%s6 + $0x38] sm:$0xff] %vm105, %v1062
    // Predicated region
    $region26: #{tpu_custom_call.1} parent=1 // pred_check
      _
    $region27: #{tpu_custom_call.1} parent=1 // pred_check_branch
      %1072 = sbr.rel (0) target = $region29
    $region28: #{tpu_custom_call.1} parent=1 // pred_region
      _
    $region29: #{tpu_custom_call.1} parent=1 // pred_fallthru
      _
    // Predicated region
    $region30: #{tpu_custom_call.1} parent=1 // pred_check
      _
    $region31: #{tpu_custom_call.1} parent=1 // pred_check_branch
      %1074 = sbr.rel (0) target = $region33
    $region32: #{tpu_custom_call.1} parent=1 // pred_region
      %s1076 = ssub.s32 128, 128
      %1077 = vsyncadd [#allocation9], %s1076
      %s1079 = sshll.u32 [#allocation8], 4
      %s1080 = int_to_ptr.vmem [resolvable:$true] %s1079
      %1082 = dma.vmem_to_hbm [thread:$0]  %s1080, 128, %s7, [#allocation9]
    $region33: #{tpu_custom_call.1} parent=1 // pred_fallthru
      _
    // Predicated region
    $region34: #{tpu_custom_call.1} parent=1 // pred_check
      _
    $region35: #{tpu_custom_call.1} parent=1 // pred_check_branch
      %1084 = sbr.rel (0) target = $region37
    $region36: #{tpu_custom_call.1} parent=1 // pred_region
      %s1086 = ssub.s32 128, 128
      %1087 = vsyncadd [#allocation11], %s1086
      %s1089 = sshll.u32 [#allocation10], 4
      %s1090 = int_to_ptr.vmem [resolvable:$true] %s1089
      %1092 = dma.vmem_to_hbm [thread:$0]  %s1090, 128, %s8, [#allocation11]
    $region37: #{tpu_custom_call.1} parent=1 // pred_fallthru
      _
    // Predicated region
    $region38: #{tpu_custom_call.1} parent=1 // pred_check
      _
    $region39: #{tpu_custom_call.1} parent=1 // pred_check_branch
      %1094 = sbr.rel (0) target = $region41
    $region40: #{tpu_custom_call.1} parent=1 // pred_region
      _
    $region41: #{tpu_custom_call.1} parent=1 // pred_fallthru
      _
    // Predicated region
    $region42: #{tpu_custom_call.1} parent=1 // pred_check
      _
    $region43: #{tpu_custom_call.1} parent=1 // pred_check_branch
      %1096 = sbr.rel (0) target = $region45
    $region44: #{tpu_custom_call.1} parent=1 // pred_region
      %1097 = dma.done [#allocation9], 128
    $region45: #{tpu_custom_call.1} parent=1 // pred_fallthru
      _
    // Predicated region
    $region46: #{tpu_custom_call.1} parent=1 // pred_check
      _
    $region47: #{tpu_custom_call.1} parent=1 // pred_check_branch
      %1099 = sbr.rel (0) target = $region49
    $region48: #{tpu_custom_call.1} parent=1 // pred_region
      %1100 = dma.done [#allocation11], 128
    $region49: #{tpu_custom_call.1} parent=1 // pred_fallthru
      _
    %1101 = vsyncpa [#allocation9], 1
    %1102 = vsyncpa [#allocation11], 1

</llo_original>
